<compile_context>
chip_gen: v6e
topology: v6e:2x2x1
jax: 0.10.0
libtpu: 0.0.40
codegen_flags: <defaults>
</compile_context>

<pallas_src>
import math

import jax
import jax.numpy as jnp
from jax import lax
from jax.experimental import pallas as pl
from jax.experimental.pallas import tpu as pltpu


def _mha_head_kernel(q_ref, k_ref, v_ref, mask_ref,
                     wq_ref, bq_ref, wk_ref, bk_ref,
                     wv_ref, bv_ref, wo_ref, bo_ref,
                     out_ref, attn_ref, acc_ref):
    """One (batch, head) grid step: project, attend, accumulate output projection."""
    h = pl.program_id(1)
    last_h = pl.num_programs(1) - 1

    q_in = q_ref[0]                      # (T1, F), input dtype (no upcast)
    k_in = k_ref[0]                      # (T2, F)
    v_in = v_ref[0]                      # (T2, F)
    mask_b = mask_ref[0] != 0            # (1|T1, T2) bool, computed once

    # Per-head weight slices, already transposed to (in, out) in the wrapper.
    wq = wq_ref[0]                       # (F, Dk)  (1/sqrt(d_k) folded in)
    wk = wk_ref[0]                       # (F, Dk)
    wv = wv_ref[0]                       # (F, Dk)
    wo = wo_ref[0]                       # (Dk, F)
    bq = bq_ref[0]                       # (1, Dk)  (1/sqrt(d_k) folded in)
    bk = bk_ref[0]                       # (1, Dk)
    bv = bv_ref[0]                       # (1, Dk)

    # forward_qkv (this head only): y = x @ W + b, f32 accumulation on the MXU.
    qh = jnp.dot(q_in, wq, preferred_element_type=jnp.float32) + bq     # (T1, Dk)
    kh = jnp.dot(k_in, wk, preferred_element_type=jnp.float32) + bk     # (T2, Dk)
    vh = jnp.dot(v_in, wv, preferred_element_type=jnp.float32) + bv     # (T2, Dk)

    # scores = (q / sqrt(d_k)) @ k^T  -- scale already folded into Wq/bq.
    scores = lax.dot_general(qh, kh, (((1,), (1,)), ((), ())),
                             preferred_element_type=jnp.float32)         # (T1, T2)

    # masked_fill(min) -> softmax -> masked_fill(0), as in the PyTorch module.
    min_val = jnp.finfo(jnp.float32).min
    scores = jnp.where(mask_b, min_val, scores)
    s_max = jnp.max(scores, axis=-1, keepdims=True)
    e = jnp.exp(scores - s_max)
    denom = jnp.sum(e, axis=-1, keepdims=True)
    probs = e * pl.reciprocal(denom, approx=True)     # EUP reciprocal, frees VALU
    probs = jnp.where(mask_b, 0.0, probs)             # (T1, T2)

    # TODO(synk): nn.Dropout is identity in eval / rate-0; training-mode dropout
    # would need pltpu.prng_seed + pltpu.stateful_bernoulli here.

    attn_ref[0, 0] = probs.astype(attn_ref.dtype)

    # Context for this head and its contribution to the output projection:
    #   out = sum_h (probs_h @ v_h) @ Wo_rows[h] + bo
    ctx = jnp.dot(probs, vh, preferred_element_type=jnp.float32)         # (T1, Dk)
    contrib = jnp.dot(ctx, wo, preferred_element_type=jnp.float32)       # (T1, F)

    @pl.when(h == 0)
    def _():
        acc_ref[...] = jnp.zeros_like(acc_ref)

    acc_ref[...] += contrib

    @pl.when(h == last_h)
    def _():
        out_ref[0] = (acc_ref[...]
                      + bo_ref[...].astype(jnp.float32)).astype(out_ref.dtype)


def multi_headed_attention(query, key, value, mask, params, *, n_head):
    """query (B,T1,F), key/value (B,T2,F), mask (B,1|T1,T2) int32 (nonzero=masked)."""
    b, t1, f = query.shape
    t2 = key.shape[1]
    assert f % n_head == 0
    d_k = f // n_head
    tm = mask.shape[1]                   # 1 or t1

    # --- one-time (per call) host/XLA-side weight repacking ---------------------
    # torch Linear computes x @ W.T + b with W of shape (out, in).  Pre-transpose
    # to (in, out), fold the 1/sqrt(d_k) score scale into Wq/bq, and slice per
    # head so the kernel never transposes or reshapes across lanes.
    scale = 1.0 / math.sqrt(d_k)

    def col_heads(w, s=1.0):             # (out, in) -> (H, F_in, Dk)
        return (w.T * s).reshape(f, n_head, d_k).transpose(1, 0, 2)

    wq_h = col_heads(params["wq"], scale)
    wk_h = col_heads(params["wk"])
    wv_h = col_heads(params["wv"])
    wo_h = params["wo"].T.reshape(n_head, d_k, f)            # (H, Dk, F)
    bq_h = (params["bq"] * scale).reshape(n_head, 1, d_k)
    bk_h = params["bk"].reshape(n_head, 1, d_k)
    bv_h = params["bv"].reshape(n_head, 1, d_k)
    bo_2 = params["bo"].reshape(1, f)

    out_dtype = query.dtype
    attn_dtype = query.dtype             # bf16 callers halve the attn writeback

    out_shape = (
        jax.ShapeDtypeStruct((b, t1, f), out_dtype),
        jax.ShapeDtypeStruct((b, n_head, t1, t2), attn_dtype),
    )

    # Advisory cost estimate so XLA schedules surrounding ops sensibly.
    itemsize = jnp.dtype(query.dtype).itemsize
    flops = 2 * b * ((t1 + 2 * t2) * f * f   # q/k/v projections
                     + 2 * t1 * t2 * f       # scores + attn@v (summed over heads)
                     + t1 * f * f)           # output projection
    transcendentals = b * n_head * t1 * t2   # exp in softmax
    bytes_accessed = (
        (b * t1 * f + 2 * b * t2 * f) * itemsize
        + b * tm * t2 * jnp.dtype(mask.dtype).itemsize
        + (4 * f * f + 4 * f) * itemsize
        + b * t1 * f * jnp.dtype(out_dtype).itemsize
        + b * n_head * t1 * t2 * jnp.dtype(attn_dtype).itemsize
    )

    return pl.pallas_call(
        _mha_head_kernel,
        out_shape=out_shape,
        grid_spec=pltpu.PrefetchScalarGridSpec(
            num_scalar_prefetch=0,
            grid=(b, n_head),                                   # head axis innermost
            in_specs=[
                pl.BlockSpec((1, t1, f),  lambda i, h: (i, 0, 0)),   # query (resident over h)
                pl.BlockSpec((1, t2, f),  lambda i, h: (i, 0, 0)),   # key
                pl.BlockSpec((1, t2, f),  lambda i, h: (i, 0, 0)),   # value
                pl.BlockSpec((1, tm, t2), lambda i, h: (i, 0, 0)),   # mask
                pl.BlockSpec((1, f, d_k), lambda i, h: (h, 0, 0)),   # Wq head slice
                pl.BlockSpec((1, 1, d_k), lambda i, h: (h, 0, 0)),   # bq head slice
                pl.BlockSpec((1, f, d_k), lambda i, h: (h, 0, 0)),   # Wk head slice
                pl.BlockSpec((1, 1, d_k), lambda i, h: (h, 0, 0)),   # bk head slice
                pl.BlockSpec((1, f, d_k), lambda i, h: (h, 0, 0)),   # Wv head slice
                pl.BlockSpec((1, 1, d_k), lambda i, h: (h, 0, 0)),   # bv head slice
                pl.BlockSpec((1, d_k, f), lambda i, h: (h, 0, 0)),   # Wo head rows
                pl.BlockSpec((1, f),      lambda i, h: (0, 0)),      # bo (constant)
            ],
            out_specs=(
                pl.BlockSpec((1, t1, f),     lambda i, h: (i, 0, 0)),     # out (reduced over h)
                pl.BlockSpec((1, 1, t1, t2), lambda i, h: (i, h, 0, 0)),  # attn
            ),
            scratch_shapes=[pltpu.VMEM((t1, f), jnp.float32)],      # head-sum accumulator
        ),
        compiler_params=pltpu.CompilerParams(
            dimension_semantics=("parallel", "arbitrary")),
        cost_estimate=pl.CostEstimate(
            flops=flops, transcendentals=transcendentals,
            bytes_accessed=bytes_accessed),
    )(query, key, value, mask,
      wq_h, bq_h, wk_h, bk_h, wv_h, bv_h, wo_h, bo_2)


def _init_params(key, n_feat):
    """Deterministic PyTorch-Linear-style init: U(-1/sqrt(F), 1/sqrt(F))."""
    bound = 1.0 / math.sqrt(n_feat)
    ks = jax.random.split(key, 8)
    u = lambda k, shape: jax.random.uniform(k, shape, jnp.float32, -bound, bound)
    return {
        "wq": u(ks[0], (n_feat, n_feat)), "bq": u(ks[1], (n_feat,)),
        "wk": u(ks[2], (n_feat, n_feat)), "bk": u(ks[3], (n_feat,)),
        "wv": u(ks[4], (n_feat, n_feat)), "bv": u(ks[5], (n_feat,)),
        "wo": u(ks[6], (n_feat, n_feat)), "bo": u(ks[7], (n_feat,)),
    }


def _reference(query, key, value, mask, params, n_head):
    """Pure-JAX reference mirroring the PyTorch forward, for sanity checking."""
    b, t1, f = query.shape
    d_k = f // n_head
    lin = lambda x, w, bias: x @ w.T + bias
    q = lin(query, params["wq"], params["bq"]).reshape(b, t1, n_head, d_k).transpose(0, 2, 1, 3)
    k = lin(key, params["wk"], params["bk"]).reshape(b, -1, n_head, d_k).transpose(0, 2, 1, 3)
    v = lin(value, params["wv"], params["bv"]).reshape(b, -1, n_head, d_k).transpose(0, 2, 1, 3)
    scores = jnp.einsum('bhtd,bhsd->bhts', q, k) / math.sqrt(d_k)
    m = (mask != 0)[:, None]  # (B,1,1|T1,T2)
    scores = jnp.where(m, jnp.finfo(jnp.float32).min, scores)
    attn = jax.nn.softmax(scores, axis=-1)
    attn = jnp.where(m, 0.0, attn)
    x = jnp.einsum('bhts,bhsd->bhtd', attn, v).transpose(0, 2, 1, 3).reshape(b, t1, f)
    return lin(x, params["wo"], params["bo"]), attn


if __name__ == "__main__":
    B, T1, T2 = 2, 8, 8
    N_HEAD, N_FEAT = 4, 32      # d_k = 8
    DROPOUT_RATE = 0.0          # eval / zero-rate dropout == identity

    root = jax.random.PRNGKey(0)
    k_q, k_k, k_v, k_m, k_p = jax.random.split(root, 5)

    query = jax.random.normal(k_q, (B, T1, N_FEAT), jnp.float32)
    key = jax.random.normal(k_k, (B, T2, N_FEAT), jnp.float32)
    value = jax.random.normal(k_v, (B, T2, N_FEAT), jnp.float32)
    # mask: (B, 1, T2), nonzero == masked position (torch masked_fill semantics)
    mask = (jax.random.uniform(k_m, (B, 1, T2)) < 0.25).astype(jnp.int32)

    params = _init_params(k_p, N_FEAT)

    out, attn = multi_headed_attention(query, key, value, mask, params, n_head=N_HEAD)
    jax.block_until_ready((out, attn))

    ref_out, ref_attn = _reference(query, key, value, mask, params, N_HEAD)
    # Tolerances account for pl.reciprocal(approx=True) in the softmax denominator
    # (~2^-12 relative error) on top of normal MXU f32 accumulation differences.
    assert jnp.allclose(attn, ref_attn, atol=2e-3, rtol=2e-3)
    assert jnp.allclose(out, ref_out, atol=1e-2, rtol=1e-2)

    print("KERNEL_OK")
</pallas_src>

<mosaic_0001>
module attributes {stable_mosaic.version = 11 : i64} {
  func.func @_mha_head_kernel(%arg0: i32, %arg1: i32, %arg2: memref<1x8x32xf32, #tpu.memory_space<vmem>>, %arg3: memref<1x8x32xf32, #tpu.memory_space<vmem>>, %arg4: memref<1x8x32xf32, #tpu.memory_space<vmem>>, %arg5: memref<1x1x8xi32, #tpu.memory_space<vmem>>, %arg6: memref<1x32x8xf32, #tpu.memory_space<vmem>>, %arg7: memref<1x1x8xf32, #tpu.memory_space<vmem>>, %arg8: memref<1x32x8xf32, #tpu.memory_space<vmem>>, %arg9: memref<1x1x8xf32, #tpu.memory_space<vmem>>, %arg10: memref<1x32x8xf32, #tpu.memory_space<vmem>>, %arg11: memref<1x1x8xf32, #tpu.memory_space<vmem>>, %arg12: memref<1x8x32xf32, #tpu.memory_space<vmem>>, %arg13: memref<1x32xf32, #tpu.memory_space<vmem>>, %arg14: memref<1x8x32xf32, #tpu.memory_space<vmem>>, %arg15: memref<1x1x8x8xf32, #tpu.memory_space<vmem>>, %arg16: memref<8x32xf32, #tpu.memory_space<vmem>>) attributes {dimension_semantics = [#tpu.dimension_semantics<parallel>, #tpu.dimension_semantics<arbitrary>], iteration_bounds = array<i64: 2, 4>, scalar_prefetch = 0 : i64, scratch_operands = 1 : i64, tpu.core_type = #tpu.core_type<tc>, window_params = [{transform_indices = @transform_0, window_bounds = array<i64: 1, 8, 32>}, {transform_indices = @transform_1, window_bounds = array<i64: 1, 8, 32>}, {transform_indices = @transform_2, window_bounds = array<i64: 1, 8, 32>}, {transform_indices = @transform_3, window_bounds = array<i64: 1, 1, 8>}, {transform_indices = @transform_4, window_bounds = array<i64: 1, 32, 8>}, {transform_indices = @transform_5, window_bounds = array<i64: 1, 1, 8>}, {transform_indices = @transform_6, window_bounds = array<i64: 1, 32, 8>}, {transform_indices = @transform_7, window_bounds = array<i64: 1, 1, 8>}, {transform_indices = @transform_8, window_bounds = array<i64: 1, 32, 8>}, {transform_indices = @transform_9, window_bounds = array<i64: 1, 1, 8>}, {transform_indices = @transform_10, window_bounds = array<i64: 1, 8, 32>}, {pipeline_mode = #tpu.pipeline_mode<synchronous>, transform_indices = @transform_11, window_bounds = array<i64: 1, 32>}, {transform_indices = @transform_12, window_bounds = array<i64: 1, 8, 32>}, {transform_indices = @transform_13, window_bounds = array<i64: 1, 1, 8, 8>}]} {
    %c0 = arith.constant 0 : index
    %c0_0 = arith.constant 0 : index
    %c0_1 = arith.constant 0 : index
    %0 = vector.load %arg2[%c0, %c0_0, %c0_1] : memref<1x8x32xf32, #tpu.memory_space<vmem>>, vector<1x8x32xf32>
    %1 = vector.shape_cast %0 : vector<1x8x32xf32> to vector<8x32xf32>
    %c0_2 = arith.constant 0 : index
    %c0_3 = arith.constant 0 : index
    %c0_4 = arith.constant 0 : index
    %2 = vector.load %arg3[%c0_2, %c0_3, %c0_4] : memref<1x8x32xf32, #tpu.memory_space<vmem>>, vector<1x8x32xf32>
    %3 = vector.shape_cast %2 : vector<1x8x32xf32> to vector<8x32xf32>
    %c0_5 = arith.constant 0 : index
    %c0_6 = arith.constant 0 : index
    %c0_7 = arith.constant 0 : index
    %4 = vector.load %arg4[%c0_5, %c0_6, %c0_7] : memref<1x8x32xf32, #tpu.memory_space<vmem>>, vector<1x8x32xf32>
    %5 = vector.shape_cast %4 : vector<1x8x32xf32> to vector<8x32xf32>
    %c0_8 = arith.constant 0 : index
    %c0_9 = arith.constant 0 : index
    %c0_10 = arith.constant 0 : index
    %6 = vector.load %arg5[%c0_8, %c0_9, %c0_10] : memref<1x1x8xi32, #tpu.memory_space<vmem>>, vector<1x1x8xi32>
    %7 = vector.shape_cast %6 : vector<1x1x8xi32> to vector<1x8xi32>
    %c0_i32 = arith.constant 0 : i32
    %8 = vector.broadcast %c0_i32 : i32 to vector<1x8xi32>
    %9 = arith.cmpi ne, %7, %8 : vector<1x8xi32>
    %c0_11 = arith.constant 0 : index
    %c0_12 = arith.constant 0 : index
    %c0_13 = arith.constant 0 : index
    %10 = vector.load %arg6[%c0_11, %c0_12, %c0_13] : memref<1x32x8xf32, #tpu.memory_space<vmem>>, vector<1x32x8xf32>
    %11 = vector.shape_cast %10 : vector<1x32x8xf32> to vector<32x8xf32>
    %c0_14 = arith.constant 0 : index
    %c0_15 = arith.constant 0 : index
    %c0_16 = arith.constant 0 : index
    %12 = vector.load %arg8[%c0_14, %c0_15, %c0_16] : memref<1x32x8xf32, #tpu.memory_space<vmem>>, vector<1x32x8xf32>
    %13 = vector.shape_cast %12 : vector<1x32x8xf32> to vector<32x8xf32>
    %c0_17 = arith.constant 0 : index
    %c0_18 = arith.constant 0 : index
    %c0_19 = arith.constant 0 : index
    %14 = vector.load %arg10[%c0_17, %c0_18, %c0_19] : memref<1x32x8xf32, #tpu.memory_space<vmem>>, vector<1x32x8xf32>
    %15 = vector.shape_cast %14 : vector<1x32x8xf32> to vector<32x8xf32>
    %c0_20 = arith.constant 0 : index
    %c0_21 = arith.constant 0 : index
    %c0_22 = arith.constant 0 : index
    %16 = vector.load %arg12[%c0_20, %c0_21, %c0_22] : memref<1x8x32xf32, #tpu.memory_space<vmem>>, vector<1x8x32xf32>
    %17 = vector.shape_cast %16 : vector<1x8x32xf32> to vector<8x32xf32>
    %c0_23 = arith.constant 0 : index
    %c0_24 = arith.constant 0 : index
    %c0_25 = arith.constant 0 : index
    %18 = vector.load %arg7[%c0_23, %c0_24, %c0_25] : memref<1x1x8xf32, #tpu.memory_space<vmem>>, vector<1x1x8xf32>
    %19 = vector.shape_cast %18 : vector<1x1x8xf32> to vector<1x8xf32>
    %c0_26 = arith.constant 0 : index
    %c0_27 = arith.constant 0 : index
    %c0_28 = arith.constant 0 : index
    %20 = vector.load %arg9[%c0_26, %c0_27, %c0_28] : memref<1x1x8xf32, #tpu.memory_space<vmem>>, vector<1x1x8xf32>
    %21 = vector.shape_cast %20 : vector<1x1x8xf32> to vector<1x8xf32>
    %c0_29 = arith.constant 0 : index
    %c0_30 = arith.constant 0 : index
    %c0_31 = arith.constant 0 : index
    %22 = vector.load %arg11[%c0_29, %c0_30, %c0_31] : memref<1x1x8xf32, #tpu.memory_space<vmem>>, vector<1x1x8xf32>
    %23 = vector.shape_cast %22 : vector<1x1x8xf32> to vector<1x8xf32>
    %cst = arith.constant dense<0.000000e+00> : vector<8x8xf32>
    %24 = tpu.matmul %1, %11, %cst {dimension_numbers = #tpu.dot_dimension_numbers<[1], [0], [0], [1], [0, 0, 1, 1], [], []>} : vector<8x32xf32>, vector<32x8xf32>, vector<8x8xf32> -> vector<8x8xf32>
    %25 = vector.broadcast %19 : vector<1x8xf32> to vector<8x8xf32>
    %26 = arith.addf %24, %25 : vector<8x8xf32>
    %cst_32 = arith.constant dense<0.000000e+00> : vector<8x8xf32>
    %27 = tpu.matmul %3, %13, %cst_32 {dimension_numbers = #tpu.dot_dimension_numbers<[1], [0], [0], [1], [0, 0, 1, 1], [], []>} : vector<8x32xf32>, vector<32x8xf32>, vector<8x8xf32> -> vector<8x8xf32>
    %28 = vector.broadcast %21 : vector<1x8xf32> to vector<8x8xf32>
    %29 = arith.addf %27, %28 : vector<8x8xf32>
    %cst_33 = arith.constant dense<0.000000e+00> : vector<8x8xf32>
    %30 = tpu.matmul %5, %15, %cst_33 {dimension_numbers = #tpu.dot_dimension_numbers<[1], [0], [0], [1], [0, 0, 1, 1], [], []>} : vector<8x32xf32>, vector<32x8xf32>, vector<8x8xf32> -> vector<8x8xf32>
    %31 = vector.broadcast %23 : vector<1x8xf32> to vector<8x8xf32>
    %32 = arith.addf %30, %31 : vector<8x8xf32>
    %cst_34 = arith.constant dense<0.000000e+00> : vector<8x8xf32>
    %33 = tpu.matmul %26, %29, %cst_34 {dimension_numbers = #tpu.dot_dimension_numbers<[1], [1], [0], [0], [0, 0, 1, 0], [], []>} : vector<8x8xf32>, vector<8x8xf32>, vector<8x8xf32> -> vector<8x8xf32>
    %cst_35 = arith.constant -3.40282347E+38 : f32
    %34 = vector.shape_cast %9 : vector<1x8xi1> to vector<1x8xi1>
    %35 = vector.broadcast %34 : vector<1x8xi1> to vector<8x8xi1>
    %36 = vector.broadcast %cst_35 : f32 to vector<8x8xf32>
    %37 = arith.select %35, %36, %33 : vector<8x8xi1>, vector<8x8xf32>
    %cst_36 = arith.constant dense<0xFF800000> : vector<8xf32>
    %38 = vector.multi_reduction <maximumf>, %37, %cst_36 [1] : vector<8x8xf32> to vector<8xf32>
    %39 = vector.shape_cast %38 : vector<8xf32> to vector<8x1xf32>
    %40 = vector.broadcast %39 : vector<8x1xf32> to vector<8x8xf32>
    %41 = arith.subf %37, %40 : vector<8x8xf32>
    %42 = math.exp %41 : vector<8x8xf32>
    %cst_37 = arith.constant dense<0.000000e+00> : vector<8xf32>
    %43 = vector.multi_reduction <add>, %42, %cst_37 [1] : vector<8x8xf32> to vector<8xf32>
    %44 = vector.shape_cast %43 : vector<8xf32> to vector<8x1xf32>
    %45 = tpu.reciprocal %44 {approx = true} : vector<8x1xf32> -> vector<8x1xf32>
    %46 = vector.broadcast %45 : vector<8x1xf32> to vector<8x8xf32>
    %47 = arith.mulf %42, %46 : vector<8x8xf32>
    %cst_38 = arith.constant 0.000000e+00 : f32
    %48 = vector.shape_cast %9 : vector<1x8xi1> to vector<1x8xi1>
    %49 = vector.broadcast %48 : vector<1x8xi1> to vector<8x8xi1>
    %50 = vector.broadcast %cst_38 : f32 to vector<8x8xf32>
    %51 = arith.select %49, %50, %47 : vector<8x8xi1>, vector<8x8xf32>
    %c0_39 = arith.constant 0 : index
    %c0_40 = arith.constant 0 : index
    %c0_41 = arith.constant 0 : index
    %c0_42 = arith.constant 0 : index
    %52 = vector.load %arg15[%c0_39, %c0_40, %c0_41, %c0_42] : memref<1x1x8x8xf32, #tpu.memory_space<vmem>>, vector<1x1x8x8xf32>
    %53 = vector.shape_cast %52 : vector<1x1x8x8xf32> to vector<8x8xf32>
    %54 = vector.shape_cast %51 : vector<8x8xf32> to vector<1x1x8x8xf32>
    tpu.vector_store %arg15[%c0_39, %c0_40, %c0_41, %c0_42], %54 {strides = array<i32>} : memref<1x1x8x8xf32, #tpu.memory_space<vmem>>, vector<1x1x8x8xf32>,
    %cst_43 = arith.constant dense<0.000000e+00> : vector<8x8xf32>
    %55 = tpu.matmul %51, %32, %cst_43 {dimension_numbers = #tpu.dot_dimension_numbers<[1], [0], [0], [1], [0, 0, 1, 1], [], []>} : vector<8x8xf32>, vector<8x8xf32>, vector<8x8xf32> -> vector<8x8xf32>
    %cst_44 = arith.constant dense<0.000000e+00> : vector<8x32xf32>
    %56 = tpu.matmul %55, %17, %cst_44 {dimension_numbers = #tpu.dot_dimension_numbers<[1], [0], [0], [1], [0, 0, 1, 1], [], []>} : vector<8x8xf32>, vector<8x32xf32>, vector<8x32xf32> -> vector<8x32xf32>
    %c0_i32_45 = arith.constant 0 : i32
    %57 = arith.cmpi eq, %arg1, %c0_i32_45 : i32
    %58 = arith.extui %57 : i1 to i32
    %c0_i32_46 = arith.constant 0 : i32
    %59 = arith.cmpi ne, %58, %c0_i32_46 : i32
    scf.if %59 {
      %cst_52 = arith.constant 0.000000e+00 : f32
      %66 = vector.broadcast %cst_52 : f32 to vector<8x32xf32>
      %c0_53 = arith.constant 0 : index
      %c0_54 = arith.constant 0 : index
      %67 = vector.load %arg16[%c0_53, %c0_54] : memref<8x32xf32, #tpu.memory_space<vmem>>, vector<8x32xf32>
      tpu.vector_store %arg16[%c0_53, %c0_54], %66 {strides = array<i32>} : memref<8x32xf32, #tpu.memory_space<vmem>>, vector<8x32xf32>,
    } else {
    }
    %c0_47 = arith.constant 0 : index
    %c0_48 = arith.constant 0 : index
    %60 = vector.load %arg16[%c0_47, %c0_48] : memref<8x32xf32, #tpu.memory_space<vmem>>, vector<8x32xf32>
    %61 = arith.addf %60, %56 : vector<8x32xf32>
    %c0_49 = arith.constant 0 : index
    %c0_50 = arith.constant 0 : index
    %62 = vector.load %arg16[%c0_49, %c0_50] : memref<8x32xf32, #tpu.memory_space<vmem>>, vector<8x32xf32>
    tpu.vector_store %arg16[%c0_49, %c0_50], %61 {strides = array<i32>} : memref<8x32xf32, #tpu.memory_space<vmem>>, vector<8x32xf32>,
    %c3_i32 = arith.constant 3 : i32
    %63 = arith.cmpi eq, %arg1, %c3_i32 : i32
    %64 = arith.extui %63 : i1 to i32
    %c0_i32_51 = arith.constant 0 : i32
    %65 = arith.cmpi ne, %64, %c0_i32_51 : i32
    scf.if %65 {
      %c0_52 = arith.constant 0 : index
      %c0_53 = arith.constant 0 : index
      %66 = vector.load %arg16[%c0_52, %c0_53] : memref<8x32xf32, #tpu.memory_space<vmem>>, vector<8x32xf32>
      %c0_54 = arith.constant 0 : index
      %c0_55 = arith.constant 0 : index
      %67 = vector.load %arg13[%c0_54, %c0_55] : memref<1x32xf32, #tpu.memory_space<vmem>>, vector<1x32xf32>
      %68 = vector.broadcast %67 : vector<1x32xf32> to vector<8x32xf32>
      %69 = arith.addf %66, %68 : vector<8x32xf32>
      %c0_56 = arith.constant 0 : index
      %c0_57 = arith.constant 0 : index
      %c0_58 = arith.constant 0 : index
      %70 = vector.load %arg14[%c0_56, %c0_57, %c0_58] : memref<1x8x32xf32, #tpu.memory_space<vmem>>, vector<1x8x32xf32>
      %71 = vector.shape_cast %70 : vector<1x8x32xf32> to vector<8x32xf32>
      %72 = vector.shape_cast %69 : vector<8x32xf32> to vector<1x8x32xf32>
      tpu.vector_store %arg14[%c0_56, %c0_57, %c0_58], %72 {strides = array<i32>} : memref<1x8x32xf32, #tpu.memory_space<vmem>>, vector<1x8x32xf32>,
    } else {
    }
    return
  }
  func.func @transform_0(%arg0: i32, %arg1: i32) -> (i32, i32, i32) {
    %c0_i32 = arith.constant 0 : i32
    %c0_i32_0 = arith.constant 0 : i32
    %c0_i32_1 = arith.constant 0 : i32
    return %arg0, %c0_i32, %c0_i32_0 : i32, i32, i32
  }
  func.func @transform_1(%arg0: i32, %arg1: i32) -> (i32, i32, i32) {
    %c0_i32 = arith.constant 0 : i32
    %c0_i32_0 = arith.constant 0 : i32
    %c0_i32_1 = arith.constant 0 : i32
    return %arg0, %c0_i32, %c0_i32_0 : i32, i32, i32
  }
  func.func @transform_2(%arg0: i32, %arg1: i32) -> (i32, i32, i32) {
    %c0_i32 = arith.constant 0 : i32
    %c0_i32_0 = arith.constant 0 : i32
    %c0_i32_1 = arith.constant 0 : i32
    return %arg0, %c0_i32, %c0_i32_0 : i32, i32, i32
  }
  func.func @transform_3(%arg0: i32, %arg1: i32) -> (i32, i32, i32) {
    %c0_i32 = arith.constant 0 : i32
    %c0_i32_0 = arith.constant 0 : i32
    %c0_i32_1 = arith.constant 0 : i32
    return %arg0, %c0_i32, %c0_i32_0 : i32, i32, i32
  }
  func.func @transform_4(%arg0: i32, %arg1: i32) -> (i32, i32, i32) {
    %c0_i32 = arith.constant 0 : i32
    %c0_i32_0 = arith.constant 0 : i32
    %c0_i32_1 = arith.constant 0 : i32
    return %arg1, %c0_i32, %c0_i32_0 : i32, i32, i32
  }
  func.func @transform_5(%arg0: i32, %arg1: i32) -> (i32, i32, i32) {
    %c0_i32 = arith.constant 0 : i32
    %c0_i32_0 = arith.constant 0 : i32
    %c0_i32_1 = arith.constant 0 : i32
    return %arg1, %c0_i32, %c0_i32_0 : i32, i32, i32
  }
  func.func @transform_6(%arg0: i32, %arg1: i32) -> (i32, i32, i32) {
    %c0_i32 = arith.constant 0 : i32
    %c0_i32_0 = arith.constant 0 : i32
    %c0_i32_1 = arith.constant 0 : i32
    return %arg1, %c0_i32, %c0_i32_0 : i32, i32, i32
  }
  func.func @transform_7(%arg0: i32, %arg1: i32) -> (i32, i32, i32) {
    %c0_i32 = arith.constant 0 : i32
    %c0_i32_0 = arith.constant 0 : i32
    %c0_i32_1 = arith.constant 0 : i32
    return %arg1, %c0_i32, %c0_i32_0 : i32, i32, i32
  }
  func.func @transform_8(%arg0: i32, %arg1: i32) -> (i32, i32, i32) {
    %c0_i32 = arith.constant 0 : i32
    %c0_i32_0 = arith.constant 0 : i32
    %c0_i32_1 = arith.constant 0 : i32
    return %arg1, %c0_i32, %c0_i32_0 : i32, i32, i32
  }
  func.func @transform_9(%arg0: i32, %arg1: i32) -> (i32, i32, i32) {
    %c0_i32 = arith.constant 0 : i32
    %c0_i32_0 = arith.constant 0 : i32
    %c0_i32_1 = arith.constant 0 : i32
    return %arg1, %c0_i32, %c0_i32_0 : i32, i32, i32
  }
  func.func @transform_10(%arg0: i32, %arg1: i32) -> (i32, i32, i32) {
    %c0_i32 = arith.constant 0 : i32
    %c0_i32_0 = arith.constant 0 : i32
    %c0_i32_1 = arith.constant 0 : i32
    return %arg1, %c0_i32, %c0_i32_0 : i32, i32, i32
  }
  func.func @transform_11(%arg0: i32, %arg1: i32) -> (i32, i32) {
    %c0_i32 = arith.constant 0 : i32
    %c0_i32_0 = arith.constant 0 : i32
    %c0_i32_1 = arith.constant 0 : i32
    return %c0_i32, %c0_i32_0 : i32, i32
  }
  func.func @transform_12(%arg0: i32, %arg1: i32) -> (i32, i32, i32) {
    %c0_i32 = arith.constant 0 : i32
    %c0_i32_0 = arith.constant 0 : i32
    %c0_i32_1 = arith.constant 0 : i32
    return %arg0, %c0_i32, %c0_i32_0 : i32, i32, i32
  }
  func.func @transform_13(%arg0: i32, %arg1: i32) -> (i32, i32, i32, i32) {
    %c0_i32 = arith.constant 0 : i32
    %c0_i32_0 = arith.constant 0 : i32
    %c0_i32_1 = arith.constant 0 : i32
    return %arg0, %arg1, %c0_i32, %c0_i32_0 : i32, i32, i32, i32
  }
}

</mosaic_0001>

<llo_original>
// kernel: tpu_custom_call.1
$region0: #{tpu_custom_call.1}
  #allocation0 [shape = 'u32[]', space=smem, size = 0x4, offset = 0x4, fixed_abs, tag = 'smem constant byte address 0x4 - core index']
  #allocation1 [shape = 'u32[144,128]{1,0:T(1,128)}', space=vmem, size = 0x12000, scoped, tag = 'internal scratch']
  #allocation2 [shape = 'f32[8,32]{1,0:T(8,128)}', space=vmem, size = 0x1000, scoped, tag = 'scratch operand']
  %s0 = inlined_call_operand.vmem [shape: f32[2,8,32], index: 0, kind: input, shape index: {}]
  %s1 = inlined_call_operand.vmem [shape: f32[2,8,32], index: 1, kind: input, shape index: {}]
  %s2 = inlined_call_operand.vmem [shape: f32[2,8,32], index: 2, kind: input, shape index: {}]
  %s3 = inlined_call_operand.vmem [shape: s32[2,1,8], index: 3, kind: input, shape index: {}]
  %s4 = inlined_call_operand.vmem [shape: f32[4,32,8], index: 4, kind: input, shape index: {}]
  %s5 = inlined_call_operand.vmem [shape: f32[4,1,8], index: 5, kind: input, shape index: {}]
  %s6 = inlined_call_operand.vmem [shape: f32[4,32,8], index: 6, kind: input, shape index: {}]
  %s7 = inlined_call_operand.vmem [shape: f32[4,1,8], index: 7, kind: input, shape index: {}]
  %s8 = inlined_call_operand.vmem [shape: f32[4,32,8], index: 8, kind: input, shape index: {}]
  %s9 = inlined_call_operand.vmem [shape: f32[4,1,8], index: 9, kind: input, shape index: {}]
  %s10 = inlined_call_operand.vmem [shape: f32[4,8,32], index: 10, kind: input, shape index: {}]
  %s11 = inlined_call_operand.vmem [shape: f32[1,32], index: 11, kind: input, shape index: {}]
  %s12 = inlined_call_operand.hbm [shape: f32[2,8,32], index: 12, kind: output, shape index: {0}]
  %s13 = inlined_call_operand.hbm [shape: f32[2,4,8,8], index: 13, kind: output, shape index: {1}]
  %14 = xla_tuple %s12, %s13
  %s15 = sld [smem:[#allocation0]]
  $region97: #{tpu_custom_call.1} parent=0
    _
  %s17 = ssub.s32 1, %s15
  %s18 = scalar_select 0, %s17, %s15
  $region1: #{tpu_custom_call.1} parent=0
    #allocation3 [shape = 'u8[8192]{0}', space=vmem, size = 0x2000, scoped, tag = 'output window, operand 0']
    #allocation4 [shape = 's32[2]{0}', space=sflag, size = 0x8, scoped, tag = 'scoped memory for tpu_custom_call.1']
    #allocation5 [shape = 'u8[8192]{0}', space=vmem, size = 0x2000, scoped, tag = 'output window, operand 1']
    #allocation6 [shape = 's32[2]{0}', space=sflag, size = 0x8, scoped, tag = 'scoped memory for tpu_custom_call.1']
    %19 = vsyncpa [#allocation4], 0
    %s20 = scalar_lea.sflag [#allocation4], 1
    %21 = vsyncpa %s20, 0
    %22 = vsyncpa [#allocation6], 0
    %s23 = scalar_lea.sflag [#allocation6], 1
    %24 = vsyncpa %s23, 0
    loop: start=0, step=1, limit=10
    $region2: #{tpu_custom_call.1} parent=1 // loop_pre_header
      _
    $region3: #{tpu_custom_call.1} parent=1 // loop_header
      %s26 = sphi 0, %s30
      %p27 = scmp.ge.s32.totalorder %s26, 10
      %s33 = sphi 0, %s45
      %s34 = sphi 0, %s41
      %s35 = sphi 0, %s33
      %s36 = sphi 0, %s34
      %s37 = sphi 0, %s35
      %s38 = sphi 0, %s36
      %s48 = sphi 0, %s50
      %s51 = sphi 0, %s48
      %s52 = sphi 0, %s51
      %s68 = sphi 0, %s52
      %s74 = sphi 0, %s76
      %s77 = sphi 0, %s74
      %s78 = sphi 0, %s77
      %s94 = sphi 0, %s78
      %s100 = sphi 0, %s102
      %s103 = sphi 0, %s100
      %s104 = sphi 0, %s103
      %s120 = sphi 0, %s104
      %s126 = sphi 0, %s128
      %s129 = sphi 0, %s126
      %s130 = sphi 0, %s129
      %s146 = sphi 0, %s130
      %s152 = sphi 0, %s154
      %s155 = sphi 0, %s152
      %s156 = sphi 0, %s155
      %s172 = sphi 0, %s156
      %s178 = sphi 0, %s180
      %s181 = sphi 0, %s178
      %s182 = sphi 0, %s181
      %s198 = sphi 0, %s182
      %s204 = sphi 0, %s206
      %s207 = sphi 0, %s204
      %s208 = sphi 0, %s207
      %s224 = sphi 0, %s208
      %s230 = sphi 0, %s232
      %s233 = sphi 0, %s230
      %s234 = sphi 0, %s233
      %s250 = sphi 0, %s234
      %s256 = sphi 0, %s258
      %s259 = sphi 0, %s256
      %s260 = sphi 0, %s259
      %s276 = sphi 0, %s260
      %s282 = sphi 0, %s284
      %s285 = sphi 0, %s282
      %s286 = sphi 0, %s285
      %s302 = sphi 0, %s286
      %s308 = sphi 0, %s310
      %s311 = sphi 0, %s308
      %s312 = sphi 0, %s311
      %s328 = sphi 0, %s312
      %s332 = sphi 0, %s332
      %s334 = sphi 0, %s332
      %s335 = sphi 0, %s334
      %s349 = sphi 0, %s335
      %s355 = sphi 0, %s357
      %s358 = sphi 0, %s355
      %s359 = sphi 0, %s358
      %s375 = sphi 0, %s359
      %s383 = sphi 0, %s385
      %s386 = sphi 0, %s383
      %s387 = sphi 0, %s386
      %s403 = sphi 0, %s387
    $region4: #{tpu_custom_call.1} parent=1 // loop_header_branch
      %29 = sbr.rel (%p27) target = $region8
    $region5: #{tpu_custom_call.1} parent=1 // loop_body
      %s31 = ssub.s32 %s26, 1
      %s32 = ssub.s32 %s26, 2
      %s39 = sadd.s32 1, %s34
      %p40 = scmp.ge.s32.totalorder %s39, 4
      %s41 = scalar_select %p40, 0, %s39
      %s42 = sadd.s32 1, %s33
      %s43 = scalar_select %p40, %s42, %s33
      %p44 = scmp.ge.s32.totalorder %s43, 2
      %s45 = scalar_select %p44, 0, %s43
      %s46 = ssub.s32 %s33, %s45
      %p47 = scmp.eq.s32.totalorder %s46, 0
      %s49 = sadd.s32 %s48, 1
      %s50 = scalar_select %p47, %s48, %s49
      %p53 = pneg %p47
      %p54 = scmp.eq.s32.totalorder %s26, 7
      %p55 = por %p53, %p54
      %p56 = scmp.ne.s32.totalorder %s48, %s51
      %p57 = scmp.eq.s32.totalorder %s26, 0
      %p58 = por %p56, %p57
      %p59 = scmp.ne.s32.totalorder %s48, %s51
      %p60 = scmp.eq.s32.totalorder %s31, 7
      %p61 = por %p59, %p60
      %p62 = scmp.ne.s32.totalorder %s51, %s52
      %p63 = scmp.eq.s32.totalorder %s31, 0
      %p64 = por %p62, %p63
      %p65 = scmp.ne.s32.totalorder %s51, %s52
      %p66 = scmp.eq.s32.totalorder %s32, 7
      %p67 = por %p65, %p66
      %p69 = scmp.ne.s32.totalorder %s52, %s68
      %p70 = scmp.eq.s32.totalorder %s32, 0
      %p71 = por %p69, %p70
      %s72 = ssub.s32 %s33, %s45
      %p73 = scmp.eq.s32.totalorder %s72, 0
      %s75 = sadd.s32 %s74, 1
      %s76 = scalar_select %p73, %s74, %s75
      %p79 = pneg %p73
      %p80 = scmp.eq.s32.totalorder %s26, 7
      %p81 = por %p79, %p80
      %p82 = scmp.ne.s32.totalorder %s74, %s77
      %p83 = scmp.eq.s32.totalorder %s26, 0
      %p84 = por %p82, %p83
      %p85 = scmp.ne.s32.totalorder %s74, %s77
      %p86 = scmp.eq.s32.totalorder %s31, 7
      %p87 = por %p85, %p86
      %p88 = scmp.ne.s32.totalorder %s77, %s78
      %p89 = scmp.eq.s32.totalorder %s31, 0
      %p90 = por %p88, %p89
      %p91 = scmp.ne.s32.totalorder %s77, %s78
      %p92 = scmp.eq.s32.totalorder %s32, 7
      %p93 = por %p91, %p92
      %p95 = scmp.ne.s32.totalorder %s78, %s94
      %p96 = scmp.eq.s32.totalorder %s32, 0
      %p97 = por %p95, %p96
      %s98 = ssub.s32 %s33, %s45
      %p99 = scmp.eq.s32.totalorder %s98, 0
      %s101 = sadd.s32 %s100, 1
      %s102 = scalar_select %p99, %s100, %s101
      %p105 = pneg %p99
      %p106 = scmp.eq.s32.totalorder %s26, 7
      %p107 = por %p105, %p106
      %p108 = scmp.ne.s32.totalorder %s100, %s103
      %p109 = scmp.eq.s32.totalorder %s26, 0
      %p110 = por %p108, %p109
      %p111 = scmp.ne.s32.totalorder %s100, %s103
      %p112 = scmp.eq.s32.totalorder %s31, 7
      %p113 = por %p111, %p112
      %p114 = scmp.ne.s32.totalorder %s103, %s104
      %p115 = scmp.eq.s32.totalorder %s31, 0
      %p116 = por %p114, %p115
      %p117 = scmp.ne.s32.totalorder %s103, %s104
      %p118 = scmp.eq.s32.totalorder %s32, 7
      %p119 = por %p117, %p118
      %p121 = scmp.ne.s32.totalorder %s104, %s120
      %p122 = scmp.eq.s32.totalorder %s32, 0
      %p123 = por %p121, %p122
      %s124 = ssub.s32 %s33, %s45
      %p125 = scmp.eq.s32.totalorder %s124, 0
      %s127 = sadd.s32 %s126, 1
      %s128 = scalar_select %p125, %s126, %s127
      %p131 = pneg %p125
      %p132 = scmp.eq.s32.totalorder %s26, 7
      %p133 = por %p131, %p132
      %p134 = scmp.ne.s32.totalorder %s126, %s129
      %p135 = scmp.eq.s32.totalorder %s26, 0
      %p136 = por %p134, %p135
      %p137 = scmp.ne.s32.totalorder %s126, %s129
      %p138 = scmp.eq.s32.totalorder %s31, 7
      %p139 = por %p137, %p138
      %p140 = scmp.ne.s32.totalorder %s129, %s130
      %p141 = scmp.eq.s32.totalorder %s31, 0
      %p142 = por %p140, %p141
      %p143 = scmp.ne.s32.totalorder %s129, %s130
      %p144 = scmp.eq.s32.totalorder %s32, 7
      %p145 = por %p143, %p144
      %p147 = scmp.ne.s32.totalorder %s130, %s146
      %p148 = scmp.eq.s32.totalorder %s32, 0
      %p149 = por %p147, %p148
      %s150 = ssub.s32 %s34, %s41
      %p151 = scmp.eq.s32.totalorder %s150, 0
      %s153 = sadd.s32 %s152, 1
      %s154 = scalar_select %p151, %s152, %s153
      %p157 = pneg %p151
      %p158 = scmp.eq.s32.totalorder %s26, 7
      %p159 = por %p157, %p158
      %p160 = scmp.ne.s32.totalorder %s152, %s155
      %p161 = scmp.eq.s32.totalorder %s26, 0
      %p162 = por %p160, %p161
      %p163 = scmp.ne.s32.totalorder %s152, %s155
      %p164 = scmp.eq.s32.totalorder %s31, 7
      %p165 = por %p163, %p164
      %p166 = scmp.ne.s32.totalorder %s155, %s156
      %p167 = scmp.eq.s32.totalorder %s31, 0
      %p168 = por %p166, %p167
      %p169 = scmp.ne.s32.totalorder %s155, %s156
      %p170 = scmp.eq.s32.totalorder %s32, 7
      %p171 = por %p169, %p170
      %p173 = scmp.ne.s32.totalorder %s156, %s172
      %p174 = scmp.eq.s32.totalorder %s32, 0
      %p175 = por %p173, %p174
      %s176 = ssub.s32 %s34, %s41
      %p177 = scmp.eq.s32.totalorder %s176, 0
      %s179 = sadd.s32 %s178, 1
      %s180 = scalar_select %p177, %s178, %s179
      %p183 = pneg %p177
      %p184 = scmp.eq.s32.totalorder %s26, 7
      %p185 = por %p183, %p184
      %p186 = scmp.ne.s32.totalorder %s178, %s181
      %p187 = scmp.eq.s32.totalorder %s26, 0
      %p188 = por %p186, %p187
      %p189 = scmp.ne.s32.totalorder %s178, %s181
      %p190 = scmp.eq.s32.totalorder %s31, 7
      %p191 = por %p189, %p190
      %p192 = scmp.ne.s32.totalorder %s181, %s182
      %p193 = scmp.eq.s32.totalorder %s31, 0
      %p194 = por %p192, %p193
      %p195 = scmp.ne.s32.totalorder %s181, %s182
      %p196 = scmp.eq.s32.totalorder %s32, 7
      %p197 = por %p195, %p196
      %p199 = scmp.ne.s32.totalorder %s182, %s198
      %p200 = scmp.eq.s32.totalorder %s32, 0
      %p201 = por %p199, %p200
      %s202 = ssub.s32 %s34, %s41
      %p203 = scmp.eq.s32.totalorder %s202, 0
      %s205 = sadd.s32 %s204, 1
      %s206 = scalar_select %p203, %s204, %s205
      %p209 = pneg %p203
      %p210 = scmp.eq.s32.totalorder %s26, 7
      %p211 = por %p209, %p210
      %p212 = scmp.ne.s32.totalorder %s204, %s207
      %p213 = scmp.eq.s32.totalorder %s26, 0
      %p214 = por %p212, %p213
      %p215 = scmp.ne.s32.totalorder %s204, %s207
      %p216 = scmp.eq.s32.totalorder %s31, 7
      %p217 = por %p215, %p216
      %p218 = scmp.ne.s32.totalorder %s207, %s208
      %p219 = scmp.eq.s32.totalorder %s31, 0
      %p220 = por %p218, %p219
      %p221 = scmp.ne.s32.totalorder %s207, %s208
      %p222 = scmp.eq.s32.totalorder %s32, 7
      %p223 = por %p221, %p222
      %p225 = scmp.ne.s32.totalorder %s208, %s224
      %p226 = scmp.eq.s32.totalorder %s32, 0
      %p227 = por %p225, %p226
      %s228 = ssub.s32 %s34, %s41
      %p229 = scmp.eq.s32.totalorder %s228, 0
      %s231 = sadd.s32 %s230, 1
      %s232 = scalar_select %p229, %s230, %s231
      %p235 = pneg %p229
      %p236 = scmp.eq.s32.totalorder %s26, 7
      %p237 = por %p235, %p236
      %p238 = scmp.ne.s32.totalorder %s230, %s233
      %p239 = scmp.eq.s32.totalorder %s26, 0
      %p240 = por %p238, %p239
      %p241 = scmp.ne.s32.totalorder %s230, %s233
      %p242 = scmp.eq.s32.totalorder %s31, 7
      %p243 = por %p241, %p242
      %p244 = scmp.ne.s32.totalorder %s233, %s234
      %p245 = scmp.eq.s32.totalorder %s31, 0
      %p246 = por %p244, %p245
      %p247 = scmp.ne.s32.totalorder %s233, %s234
      %p248 = scmp.eq.s32.totalorder %s32, 7
      %p249 = por %p247, %p248
      %p251 = scmp.ne.s32.totalorder %s234, %s250
      %p252 = scmp.eq.s32.totalorder %s32, 0
      %p253 = por %p251, %p252
      %s254 = ssub.s32 %s34, %s41
      %p255 = scmp.eq.s32.totalorder %s254, 0
      %s257 = sadd.s32 %s256, 1
      %s258 = scalar_select %p255, %s256, %s257
      %p261 = pneg %p255
      %p262 = scmp.eq.s32.totalorder %s26, 7
      %p263 = por %p261, %p262
      %p264 = scmp.ne.s32.totalorder %s256, %s259
      %p265 = scmp.eq.s32.totalorder %s26, 0
      %p266 = por %p264, %p265
      %p267 = scmp.ne.s32.totalorder %s256, %s259
      %p268 = scmp.eq.s32.totalorder %s31, 7
      %p269 = por %p267, %p268
      %p270 = scmp.ne.s32.totalorder %s259, %s260
      %p271 = scmp.eq.s32.totalorder %s31, 0
      %p272 = por %p270, %p271
      %p273 = scmp.ne.s32.totalorder %s259, %s260
      %p274 = scmp.eq.s32.totalorder %s32, 7
      %p275 = por %p273, %p274
      %p277 = scmp.ne.s32.totalorder %s260, %s276
      %p278 = scmp.eq.s32.totalorder %s32, 0
      %p279 = por %p277, %p278
      %s280 = ssub.s32 %s34, %s41
      %p281 = scmp.eq.s32.totalorder %s280, 0
      %s283 = sadd.s32 %s282, 1
      %s284 = scalar_select %p281, %s282, %s283
      %p287 = pneg %p281
      %p288 = scmp.eq.s32.totalorder %s26, 7
      %p289 = por %p287, %p288
      %p290 = scmp.ne.s32.totalorder %s282, %s285
      %p291 = scmp.eq.s32.totalorder %s26, 0
      %p292 = por %p290, %p291
      %p293 = scmp.ne.s32.totalorder %s282, %s285
      %p294 = scmp.eq.s32.totalorder %s31, 7
      %p295 = por %p293, %p294
      %p296 = scmp.ne.s32.totalorder %s285, %s286
      %p297 = scmp.eq.s32.totalorder %s31, 0
      %p298 = por %p296, %p297
      %p299 = scmp.ne.s32.totalorder %s285, %s286
      %p300 = scmp.eq.s32.totalorder %s32, 7
      %p301 = por %p299, %p300
      %p303 = scmp.ne.s32.totalorder %s286, %s302
      %p304 = scmp.eq.s32.totalorder %s32, 0
      %p305 = por %p303, %p304
      %s306 = ssub.s32 %s34, %s41
      %p307 = scmp.eq.s32.totalorder %s306, 0
      %s309 = sadd.s32 %s308, 1
      %s310 = scalar_select %p307, %s308, %s309
      %p313 = pneg %p307
      %p314 = scmp.eq.s32.totalorder %s26, 7
      %p315 = por %p313, %p314
      %p316 = scmp.ne.s32.totalorder %s308, %s311
      %p317 = scmp.eq.s32.totalorder %s26, 0
      %p318 = por %p316, %p317
      %p319 = scmp.ne.s32.totalorder %s308, %s311
      %p320 = scmp.eq.s32.totalorder %s31, 7
      %p321 = por %p319, %p320
      %p322 = scmp.ne.s32.totalorder %s311, %s312
      %p323 = scmp.eq.s32.totalorder %s31, 0
      %p324 = por %p322, %p323
      %p325 = scmp.ne.s32.totalorder %s311, %s312
      %p326 = scmp.eq.s32.totalorder %s32, 7
      %p327 = por %p325, %p326
      %p329 = scmp.ne.s32.totalorder %s312, %s328
      %p330 = scmp.eq.s32.totalorder %s32, 0
      %p331 = por %p329, %p330
      %s333 = sadd.s32 %s332, 1
      %p336 = scmp.eq.s32.totalorder %s26, 7
      %p337 = scmp.ne.s32.totalorder %s332, %s334
      %p338 = scmp.eq.s32.totalorder %s26, 0
      %p339 = por %p337, %p338
      %p340 = scmp.ne.s32.totalorder %s332, %s334
      %p341 = scmp.eq.s32.totalorder %s31, 7
      %p342 = por %p340, %p341
      %p343 = scmp.ne.s32.totalorder %s334, %s335
      %p344 = scmp.eq.s32.totalorder %s31, 0
      %p345 = por %p343, %p344
      %p346 = scmp.ne.s32.totalorder %s334, %s335
      %p347 = scmp.eq.s32.totalorder %s32, 7
      %p348 = por %p346, %p347
      %p350 = scmp.ne.s32.totalorder %s335, %s349
      %p351 = scmp.eq.s32.totalorder %s32, 0
      %p352 = por %p350, %p351
      %s353 = ssub.s32 %s33, %s45
      %p354 = scmp.eq.s32.totalorder %s353, 0
      %s356 = sadd.s32 %s355, 1
      %s357 = scalar_select %p354, %s355, %s356
      %p360 = pneg %p354
      %p361 = scmp.eq.s32.totalorder %s26, 7
      %p362 = por %p360, %p361
      %p363 = scmp.ne.s32.totalorder %s355, %s358
      %p364 = scmp.eq.s32.totalorder %s26, 0
      %p365 = por %p363, %p364
      %p366 = scmp.ne.s32.totalorder %s355, %s358
      %p367 = scmp.eq.s32.totalorder %s31, 7
      %p368 = por %p366, %p367
      %p369 = scmp.ne.s32.totalorder %s358, %s359
      %p370 = scmp.eq.s32.totalorder %s31, 0
      %p371 = por %p369, %p370
      %p372 = scmp.ne.s32.totalorder %s358, %s359
      %p373 = scmp.eq.s32.totalorder %s32, 7
      %p374 = por %p372, %p373
      %p376 = scmp.ne.s32.totalorder %s359, %s375
      %p377 = scmp.eq.s32.totalorder %s32, 0
      %p378 = por %p376, %p377
      %s379 = ssub.s32 %s33, %s45
      %s380 = ssub.s32 %s34, %s41
      %s381 = sor.u32 %s379, %s380
      %p382 = scmp.eq.s32.totalorder %s381, 0
      %s384 = sadd.s32 %s383, 1
      %s385 = scalar_select %p382, %s383, %s384
      %p388 = pneg %p382
      %p389 = scmp.eq.s32.totalorder %s26, 7
      %p390 = por %p388, %p389
      %p391 = scmp.ne.s32.totalorder %s383, %s386
      %p392 = scmp.eq.s32.totalorder %s26, 0
      %p393 = por %p391, %p392
      %p394 = scmp.ne.s32.totalorder %s383, %s386
      %p395 = scmp.eq.s32.totalorder %s31, 7
      %p396 = por %p394, %p395
      %p397 = scmp.ne.s32.totalorder %s386, %s387
      %p398 = scmp.eq.s32.totalorder %s31, 0
      %p399 = por %p397, %p398
      %p400 = scmp.ne.s32.totalorder %s386, %s387
      %p401 = scmp.eq.s32.totalorder %s32, 7
      %p402 = por %p400, %p401
      %p404 = scmp.ne.s32.totalorder %s387, %s403
      %p405 = scmp.eq.s32.totalorder %s32, 0
      %p406 = por %p404, %p405
      %p407 = scmp.le.s32.totalorder 1, %s26
      %p408 = scmp.lt.s32.totalorder %s26, 9
      %p409 = pnand %p407, %p408
      %p410 = pneg %p409
      // Predicated region
      $region9: #{tpu_custom_call.1} parent=5 // pred_check
        _
      $region10: #{tpu_custom_call.1} parent=5 // pred_check_branch
        %412 = sbr.rel (%p409) target = $region12
      $region11: #{tpu_custom_call.1} parent=5 // pred_region
        %s413 = ssub.s32 %s26, 1
        // Predicated region
        $region13: #{tpu_custom_call.1} parent=11 // pred_check
          %p414 = pneg %p345
        $region14: #{tpu_custom_call.1} parent=11 // pred_check_branch
          %416 = sbr.rel (%p414) target = $region16
        $region15: #{tpu_custom_call.1} parent=11 // pred_region
          _
        $region16: #{tpu_custom_call.1} parent=11 // pred_fallthru
          _
      $region12: #{tpu_custom_call.1} parent=5 // pred_fallthru
        _
      %p417 = scmp.lt.s32.totalorder %s26, 8
      // Predicated region
      $region17: #{tpu_custom_call.1} parent=5 // pred_check
        %p418 = pneg %p417
      $region18: #{tpu_custom_call.1} parent=5 // pred_check_branch
        %420 = sbr.rel (%p418) target = $region20
      $region19: #{tpu_custom_call.1} parent=5 // pred_region
        // Predicated region
        $region21: #{tpu_custom_call.1} parent=19 // pred_check
          %p421 = pneg %p58
        $region22: #{tpu_custom_call.1} parent=19 // pred_check_branch
          %423 = sbr.rel (%p421) target = $region24
        $region23: #{tpu_custom_call.1} parent=19 // pred_region
          %p424 = scmp.lt.s32.totalorder %s33, 1
          %s425 = scalar_select %p424, %s33, 1
          %s426 = smul.addr %s425, 8
          %s427 = scalar_lea.vmem %s0, %s426
        $region24: #{tpu_custom_call.1} parent=19 // pred_fallthru
          _
        // Predicated region
        $region25: #{tpu_custom_call.1} parent=19 // pred_check
          %p428 = pneg %p84
        $region26: #{tpu_custom_call.1} parent=19 // pred_check_branch
          %430 = sbr.rel (%p428) target = $region28
        $region27: #{tpu_custom_call.1} parent=19 // pred_region
          %p431 = scmp.lt.s32.totalorder %s33, 1
          %s432 = scalar_select %p431, %s33, 1
          %s433 = smul.addr %s432, 8
          %s434 = scalar_lea.vmem %s1, %s433
        $region28: #{tpu_custom_call.1} parent=19 // pred_fallthru
          _
        // Predicated region
        $region29: #{tpu_custom_call.1} parent=19 // pred_check
          %p435 = pneg %p110
        $region30: #{tpu_custom_call.1} parent=19 // pred_check_branch
          %437 = sbr.rel (%p435) target = $region32
        $region31: #{tpu_custom_call.1} parent=19 // pred_region
          %p438 = scmp.lt.s32.totalorder %s33, 1
          %s439 = scalar_select %p438, %s33, 1
          %s440 = smul.addr %s439, 8
          %s441 = scalar_lea.vmem %s2, %s440
        $region32: #{tpu_custom_call.1} parent=19 // pred_fallthru
          _
        // Predicated region
        $region33: #{tpu_custom_call.1} parent=19 // pred_check
          %p442 = pneg %p136
        $region34: #{tpu_custom_call.1} parent=19 // pred_check_branch
          %444 = sbr.rel (%p442) target = $region36
        $region35: #{tpu_custom_call.1} parent=19 // pred_region
          %p445 = scmp.lt.s32.totalorder %s33, 1
          %s446 = scalar_select %p445, %s33, 1
          %s447 = scalar_lea.vmem %s3, %s446
        $region36: #{tpu_custom_call.1} parent=19 // pred_fallthru
          _
        // Predicated region
        $region37: #{tpu_custom_call.1} parent=19 // pred_check
          %p448 = pneg %p162
        $region38: #{tpu_custom_call.1} parent=19 // pred_check_branch
          %450 = sbr.rel (%p448) target = $region40
        $region39: #{tpu_custom_call.1} parent=19 // pred_region
          %p451 = scmp.lt.s32.totalorder %s34, 3
          %s452 = scalar_select %p451, %s34, 3
          %s453 = smul.addr %s452, 4
          %s454 = smul.addr %s453, 8
          %s455 = scalar_lea.vmem %s4, %s454
        $region40: #{tpu_custom_call.1} parent=19 // pred_fallthru
          _
        // Predicated region
        $region41: #{tpu_custom_call.1} parent=19 // pred_check
          %p456 = pneg %p188
        $region42: #{tpu_custom_call.1} parent=19 // pred_check_branch
          %458 = sbr.rel (%p456) target = $region44
        $region43: #{tpu_custom_call.1} parent=19 // pred_region
          %p459 = scmp.lt.s32.totalorder %s34, 3
          %s460 = scalar_select %p459, %s34, 3
          %s461 = scalar_lea.vmem %s5, %s460
        $region44: #{tpu_custom_call.1} parent=19 // pred_fallthru
          _
        // Predicated region
        $region45: #{tpu_custom_call.1} parent=19 // pred_check
          %p462 = pneg %p214
        $region46: #{tpu_custom_call.1} parent=19 // pred_check_branch
          %464 = sbr.rel (%p462) target = $region48
        $region47: #{tpu_custom_call.1} parent=19 // pred_region
          %p465 = scmp.lt.s32.totalorder %s34, 3
          %s466 = scalar_select %p465, %s34, 3
          %s467 = smul.addr %s466, 4
          %s468 = smul.addr %s467, 8
          %s469 = scalar_lea.vmem %s6, %s468
        $region48: #{tpu_custom_call.1} parent=19 // pred_fallthru
          _
        // Predicated region
        $region49: #{tpu_custom_call.1} parent=19 // pred_check
          %p470 = pneg %p240
        $region50: #{tpu_custom_call.1} parent=19 // pred_check_branch
          %472 = sbr.rel (%p470) target = $region52
        $region51: #{tpu_custom_call.1} parent=19 // pred_region
          %p473 = scmp.lt.s32.totalorder %s34, 3
          %s474 = scalar_select %p473, %s34, 3
          %s475 = scalar_lea.vmem %s7, %s474
        $region52: #{tpu_custom_call.1} parent=19 // pred_fallthru
          _
        // Predicated region
        $region53: #{tpu_custom_call.1} parent=19 // pred_check
          %p476 = pneg %p266
        $region54: #{tpu_custom_call.1} parent=19 // pred_check_branch
          %478 = sbr.rel (%p476) target = $region56
        $region55: #{tpu_custom_call.1} parent=19 // pred_region
          %p479 = scmp.lt.s32.totalorder %s34, 3
          %s480 = scalar_select %p479, %s34, 3
          %s481 = smul.addr %s480, 4
          %s482 = smul.addr %s481, 8
          %s483 = scalar_lea.vmem %s8, %s482
        $region56: #{tpu_custom_call.1} parent=19 // pred_fallthru
          _
        // Predicated region
        $region57: #{tpu_custom_call.1} parent=19 // pred_check
          %p484 = pneg %p292
        $region58: #{tpu_custom_call.1} parent=19 // pred_check_branch
          %486 = sbr.rel (%p484) target = $region60
        $region59: #{tpu_custom_call.1} parent=19 // pred_region
          %p487 = scmp.lt.s32.totalorder %s34, 3
          %s488 = scalar_select %p487, %s34, 3
          %s489 = scalar_lea.vmem %s9, %s488
        $region60: #{tpu_custom_call.1} parent=19 // pred_fallthru
          _
        // Predicated region
        $region61: #{tpu_custom_call.1} parent=19 // pred_check
          %p490 = pneg %p318
        $region62: #{tpu_custom_call.1} parent=19 // pred_check_branch
          %492 = sbr.rel (%p490) target = $region64
        $region63: #{tpu_custom_call.1} parent=19 // pred_region
          %p493 = scmp.lt.s32.totalorder %s34, 3
          %s494 = scalar_select %p493, %s34, 3
          %s495 = smul.addr %s494, 8
          %s496 = scalar_lea.vmem %s10, %s495
        $region64: #{tpu_custom_call.1} parent=19 // pred_fallthru
          _
      $region20: #{tpu_custom_call.1} parent=5 // pred_fallthru
        _
      %p497 = scmp.le.s32.totalorder 1, %s26
      %p498 = scmp.lt.s32.totalorder %s26, 9
      %p499 = pnand %p497, %p498
      %p500 = pneg %p499
      // Predicated region
      $region65: #{tpu_custom_call.1} parent=5 // pred_check
        _
      $region66: #{tpu_custom_call.1} parent=5 // pred_check_branch
        %502 = sbr.rel (%p499) target = $region68
      $region67: #{tpu_custom_call.1} parent=5 // pred_region
        %s503 = ssub.s32 %s26, 1
        %p504 = scmp.lt.s32.totalorder %s35, 1
        %s505 = scalar_select %p504, %s35, 1
        %s506 = smul.addr %s505, 8
        %s507 = scalar_lea.vmem %s0, %s506
        %p508 = pneg %p64
        %p509 = pneg %p61
        %p510 = scmp.lt.s32.totalorder %s35, 1
        %s511 = scalar_select %p510, %s35, 1
        %s512 = smul.addr %s511, 8
        %s513 = scalar_lea.vmem %s1, %s512
        %p514 = pneg %p90
        %p515 = pneg %p87
        %p516 = scmp.lt.s32.totalorder %s35, 1
        %s517 = scalar_select %p516, %s35, 1
        %s518 = smul.addr %s517, 8
        %s519 = scalar_lea.vmem %s2, %s518
        %p520 = pneg %p116
        %p521 = pneg %p113
        %p522 = scmp.lt.s32.totalorder %s35, 1
        %s523 = scalar_select %p522, %s35, 1
        %s524 = scalar_lea.vmem %s3, %s523
        %p525 = pneg %p142
        %p526 = pneg %p139
        %p527 = scmp.lt.s32.totalorder %s36, 3
        %s528 = scalar_select %p527, %s36, 3
        %s529 = smul.addr %s528, 4
        %s530 = smul.addr %s529, 8
        %s531 = scalar_lea.vmem %s4, %s530
        %p532 = pneg %p168
        %p533 = pneg %p165
        %p534 = scmp.lt.s32.totalorder %s36, 3
        %s535 = scalar_select %p534, %s36, 3
        %s536 = scalar_lea.vmem %s5, %s535
        %p537 = pneg %p194
        %p538 = pneg %p191
        %p539 = scmp.lt.s32.totalorder %s36, 3
        %s540 = scalar_select %p539, %s36, 3
        %s541 = smul.addr %s540, 4
        %s542 = smul.addr %s541, 8
        %s543 = scalar_lea.vmem %s6, %s542
        %p544 = pneg %p220
        %p545 = pneg %p217
        %p546 = scmp.lt.s32.totalorder %s36, 3
        %s547 = scalar_select %p546, %s36, 3
        %s548 = scalar_lea.vmem %s7, %s547
        %p549 = pneg %p246
        %p550 = pneg %p243
        %p551 = scmp.lt.s32.totalorder %s36, 3
        %s552 = scalar_select %p551, %s36, 3
        %s553 = smul.addr %s552, 4
        %s554 = smul.addr %s553, 8
        %s555 = scalar_lea.vmem %s8, %s554
        %p556 = pneg %p272
        %p557 = pneg %p269
        %p558 = scmp.lt.s32.totalorder %s36, 3
        %s559 = scalar_select %p558, %s36, 3
        %s560 = scalar_lea.vmem %s9, %s559
        %p561 = pneg %p298
        %p562 = pneg %p295
        %p563 = scmp.lt.s32.totalorder %s36, 3
        %s564 = scalar_select %p563, %s36, 3
        %s565 = smul.addr %s564, 8
        %s566 = scalar_lea.vmem %s10, %s565
        %p567 = pneg %p324
        %p568 = pneg %p321
        %p569 = pneg %p345
        %p570 = pneg %p342
        %p571 = pneg %p371
        %p572 = pneg %p368
        %s573 = sand.u32 %s358, 1
        %s574 = scalar_lea.sflag [#allocation4], %s573
        %s575 = sand.u32 %s358, 1
        %s576 = smul.addr %s575, 8
        %s577 = scalar_lea.vmem [#allocation3], %s576
        %p578 = pneg %p399
        %p579 = pneg %p396
        %s580 = sand.u32 %s386, 1
        %s581 = scalar_lea.sflag [#allocation6], %s580
        %s582 = sand.u32 %s386, 1
        %s583 = smul.addr %s582, 8
        %s584 = scalar_lea.vmem [#allocation5], %s583
        %p585 = scmp.lt.s32.totalorder %s35, 1
        %s586 = scalar_select %p585, %s35, 1
        %s587 = smul.addr %s586, 8
        %s588 = scalar_lea.vmem %s0, %s587
        %p589 = scmp.lt.s32.totalorder %s35, 1
        %s590 = scalar_select %p589, %s35, 1
        %s591 = smul.addr %s590, 8
        %s592 = scalar_lea.vmem %s1, %s591
        %p593 = scmp.lt.s32.totalorder %s35, 1
        %s594 = scalar_select %p593, %s35, 1
        %s595 = smul.addr %s594, 8
        %s596 = scalar_lea.vmem %s2, %s595
        %p597 = scmp.lt.s32.totalorder %s35, 1
        %s598 = scalar_select %p597, %s35, 1
        %s599 = scalar_lea.vmem %s3, %s598
        %p600 = scmp.lt.s32.totalorder %s36, 3
        %s601 = scalar_select %p600, %s36, 3
        %s602 = smul.addr %s601, 4
        %s603 = smul.addr %s602, 8
        %s604 = scalar_lea.vmem %s4, %s603
        %p605 = scmp.lt.s32.totalorder %s36, 3
        %s606 = scalar_select %p605, %s36, 3
        %s607 = scalar_lea.vmem %s5, %s606
        %p608 = scmp.lt.s32.totalorder %s36, 3
        %s609 = scalar_select %p608, %s36, 3
        %s610 = smul.addr %s609, 4
        %s611 = smul.addr %s610, 8
        %s612 = scalar_lea.vmem %s6, %s611
        %p613 = scmp.lt.s32.totalorder %s36, 3
        %s614 = scalar_select %p613, %s36, 3
        %s615 = scalar_lea.vmem %s7, %s614
        %p616 = scmp.lt.s32.totalorder %s36, 3
        %s617 = scalar_select %p616, %s36, 3
        %s618 = smul.addr %s617, 4
        %s619 = smul.addr %s618, 8
        %s620 = scalar_lea.vmem %s8, %s619
        %p621 = scmp.lt.s32.totalorder %s36, 3
        %s622 = scalar_select %p621, %s36, 3
        %s623 = scalar_lea.vmem %s9, %s622
        %p624 = scmp.lt.s32.totalorder %s36, 3
        %s625 = scalar_select %p624, %s36, 3
        %s626 = smul.addr %s625, 8
        %s627 = scalar_lea.vmem %s10, %s626
        %v628 = vld [vmem:[%s588] sm:$0xff]
        %v629 = vld [vmem:[%s592] sm:$0xff]
        %v630 = vld [vmem:[%s596] sm:$0xff]
        %v631 = vld [vmem:[%s599] sm:$0x1]
        %vm632 = vcmp.ne.s32.totalorder %v631, 0
        %v633 = vld [vmem:[%s604] sm:$0xff]
        %v634 = vld [vmem:[%s604 + $0x8] sm:$0xff]
        %v635 = vld [vmem:[%s604 + $0x10] sm:$0xff]
        %v636 = vld [vmem:[%s604 + $0x18] sm:$0xff]
        %v637 = vld [vmem:[%s612] sm:$0xff]
        %v638 = vld [vmem:[%s612 + $0x8] sm:$0xff]
        %v639 = vld [vmem:[%s612 + $0x10] sm:$0xff]
        %v640 = vld [vmem:[%s612 + $0x18] sm:$0xff]
        %v641 = vld [vmem:[%s620] sm:$0xff]
        %v642 = vld [vmem:[%s620 + $0x8] sm:$0xff]
        %v643 = vld [vmem:[%s620 + $0x10] sm:$0xff]
        %v644 = vld [vmem:[%s620 + $0x18] sm:$0xff]
        %v645 = vld [vmem:[%s627] sm:$0xff]
        %v646 = vld [vmem:[%s607] sm:$0x1]
        %v647 = vld [vmem:[%s615] sm:$0x1]
        %v648 = vld [vmem:[%s623] sm:$0x1]
        %v650 = vlaneseq
        %v651 = vshrl.u32 %v650, 7
        %v652 = vsub.s32 0, %v651
        %v653 = vrot.slane %v646, %v652
        %vm655 = vcmask 261120
        %v657 = vsel %vm655, %v628, 0
        %659 = vmatprep.subr.mxu0 0.0
        %660 = vmatpush1.msra.mxu0 0.0
        %661 = vmatprep.subr.mxu0 0.0
        %662 = vmatpush1.msra.mxu0 0.0
        %663 = vmatprep.subr.mxu0 0.0
        %664 = vmatpush1.msra.mxu0 0.0
        %665 = vmatprep.subr.mxu0 0.0
        %666 = vmatpush1.msra.mxu0 0.0
        %667 = vmatprep.subr.mxu0 0.0
        %668 = vmatpush1.msra.mxu0 0.0
        %669 = vmatprep.subr.mxu0 0.0
        %670 = vmatpush1.msra.mxu0 0.0
        %671 = vmatprep.subr.mxu0 0.0
        %672 = vmatpush1.msra.mxu0 0.0
        %673 = vmatprep.subr.mxu0 0.0
        %674 = vmatpush1.msra.mxu0 0.0
        %675 = vmatprep.subr.mxu0 0.0
        %676 = vmatpush1.msra.mxu0 0.0
        %677 = vmatprep.subr.mxu0 0.0
        %678 = vmatpush1.msra.mxu0 0.0
        %679 = vmatprep.subr.mxu0 0.0
        %680 = vmatpush1.msra.mxu0 0.0
        %681 = vmatprep.subr.mxu0 0.0
        %682 = vmatpush1.msra.mxu0 0.0
        %683 = vmatprep.subr.mxu0 0.0
        %684 = vmatpush1.msra.mxu0 %v636
        %685 = vmatprep.subr.mxu0 0.0
        %686 = vmatpush1.msra.mxu0 %v635
        %687 = vmatprep.subr.mxu0 0.0
        %688 = vmatpush1.msra.mxu0 %v634
        %689 = vmatprep.subr.mxu0 0.0
        %690 = vmatpush1.msra.mxu0 %v633
        %691 = vmatprep.subr.mxu0 0.0
        %692 = vmatpush2.msra.mxu0 0.0
        %693 = vmatprep.subr.mxu0 0.0
        %694 = vmatpush2.msra.mxu0 0.0
        %695 = vmatprep.subr.mxu0 0.0
        %696 = vmatpush2.msra.mxu0 0.0
        %697 = vmatprep.subr.mxu0 0.0
        %698 = vmatpush2.msra.mxu0 0.0
        %699 = vmatprep.subr.mxu0 0.0
        %700 = vmatpush2.msra.mxu0 0.0
        %701 = vmatprep.subr.mxu0 0.0
        %702 = vmatpush2.msra.mxu0 0.0
        %703 = vmatprep.subr.mxu0 0.0
        %704 = vmatpush2.msra.mxu0 0.0
        %705 = vmatprep.subr.mxu0 0.0
        %706 = vmatpush2.msra.mxu0 0.0
        %707 = vmatprep.subr.mxu0 0.0
        %708 = vmatpush2.msra.mxu0 0.0
        %709 = vmatprep.subr.mxu0 0.0
        %710 = vmatpush2.msra.mxu0 0.0
        %711 = vmatprep.subr.mxu0 0.0
        %712 = vmatpush2.msra.mxu0 0.0
        %713 = vmatprep.subr.mxu0 0.0
        %714 = vmatpush2.msra.mxu0 0.0
        %715 = vmatprep.subr.mxu0 0.0
        %716 = vmatpush2.msra.mxu0 0.0
        %717 = vmatprep.subr.mxu0 0.0
        %718 = vmatpush2.msra.mxu0 0.0
        %719 = vmatprep.subr.mxu0 0.0
        %720 = vmatpush2.msra.mxu0 0.0
        %721 = vmatprep.subr.mxu0 0.0
        %722 = vmatpush2.msra.mxu0 0.0
        %723 = vmatprep.mubr.f32.mxu0 0.0
        %724 = vmatmul.mubr.f32.gmra.mxu0 %v657
        %v725 = vpop.f32.mrf.mxu0
        %v726 = vadd.f32 %v653, %v725
        %v727 = vpop.f32.mrf.mxu0
        %728 = vdwg.mxu0
        %v730 = vlaneseq
        %v731 = vshrl.u32 %v730, 7
        %v732 = vsub.s32 0, %v731
        %v733 = vrot.slane %v647, %v732
        %v736 = vsel %vm655, %v629, 0
        %738 = vmatprep.subr.mxu0 0.0
        %739 = vmatpush1.msra.mxu0 0.0
        %740 = vmatprep.subr.mxu0 0.0
        %741 = vmatpush1.msra.mxu0 0.0
        %742 = vmatprep.subr.mxu0 0.0
        %743 = vmatpush1.msra.mxu0 0.0
        %744 = vmatprep.subr.mxu0 0.0
        %745 = vmatpush1.msra.mxu0 0.0
        %746 = vmatprep.subr.mxu0 0.0
        %747 = vmatpush1.msra.mxu0 0.0
        %748 = vmatprep.subr.mxu0 0.0
        %749 = vmatpush1.msra.mxu0 0.0
        %750 = vmatprep.subr.mxu0 0.0
        %751 = vmatpush1.msra.mxu0 0.0
        %752 = vmatprep.subr.mxu0 0.0
        %753 = vmatpush1.msra.mxu0 0.0
        %754 = vmatprep.subr.mxu0 0.0
        %755 = vmatpush1.msra.mxu0 0.0
        %756 = vmatprep.subr.mxu0 0.0
        %757 = vmatpush1.msra.mxu0 0.0
        %758 = vmatprep.subr.mxu0 0.0
        %759 = vmatpush1.msra.mxu0 0.0
        %760 = vmatprep.subr.mxu0 0.0
        %761 = vmatpush1.msra.mxu0 0.0
        %762 = vmatprep.subr.mxu0 0.0
        %763 = vmatpush1.msra.mxu0 %v640
        %764 = vmatprep.subr.mxu0 0.0
        %765 = vmatpush1.msra.mxu0 %v639
        %766 = vmatprep.subr.mxu0 0.0
        %767 = vmatpush1.msra.mxu0 %v638
        %768 = vmatprep.subr.mxu0 0.0
        %769 = vmatpush1.msra.mxu0 %v637
        %770 = vmatprep.subr.mxu0 0.0
        %771 = vmatpush2.msra.mxu0 0.0
        %772 = vmatprep.subr.mxu0 0.0
        %773 = vmatpush2.msra.mxu0 0.0
        %774 = vmatprep.subr.mxu0 0.0
        %775 = vmatpush2.msra.mxu0 0.0
        %776 = vmatprep.subr.mxu0 0.0
        %777 = vmatpush2.msra.mxu0 0.0
        %778 = vmatprep.subr.mxu0 0.0
        %779 = vmatpush2.msra.mxu0 0.0
        %780 = vmatprep.subr.mxu0 0.0
        %781 = vmatpush2.msra.mxu0 0.0
        %782 = vmatprep.subr.mxu0 0.0
        %783 = vmatpush2.msra.mxu0 0.0
        %784 = vmatprep.subr.mxu0 0.0
        %785 = vmatpush2.msra.mxu0 0.0
        %786 = vmatprep.subr.mxu0 0.0
        %787 = vmatpush2.msra.mxu0 0.0
        %788 = vmatprep.subr.mxu0 0.0
        %789 = vmatpush2.msra.mxu0 0.0
        %790 = vmatprep.subr.mxu0 0.0
        %791 = vmatpush2.msra.mxu0 0.0
        %792 = vmatprep.subr.mxu0 0.0
        %793 = vmatpush2.msra.mxu0 0.0
        %794 = vmatprep.subr.mxu0 0.0
        %795 = vmatpush2.msra.mxu0 0.0
        %796 = vmatprep.subr.mxu0 0.0
        %797 = vmatpush2.msra.mxu0 0.0
        %798 = vmatprep.subr.mxu0 0.0
        %799 = vmatpush2.msra.mxu0 0.0
        %800 = vmatprep.subr.mxu0 0.0
        %801 = vmatpush2.msra.mxu0 0.0
        %802 = vmatprep.mubr.f32.mxu0 0.0
        %803 = vmatmul.mubr.f32.gmra.mxu0 %v736
        %v804 = vpop.f32.mrf.mxu0
        %v805 = vadd.f32 %v733, %v804
        %v806 = vpop.f32.mrf.mxu0
        %807 = vdwg.mxu0
        %v809 = vlaneseq
        %v810 = vshrl.u32 %v809, 7
        %v811 = vsub.s32 0, %v810
        %v812 = vrot.slane %v648, %v811
        %v815 = vsel %vm655, %v630, 0
        %817 = vmatprep.subr.mxu0 0.0
        %818 = vmatpush1.msra.mxu0 0.0
        %819 = vmatprep.subr.mxu0 0.0
        %820 = vmatpush1.msra.mxu0 0.0
        %821 = vmatprep.subr.mxu0 0.0
        %822 = vmatpush1.msra.mxu0 0.0
        %823 = vmatprep.subr.mxu0 0.0
        %824 = vmatpush1.msra.mxu0 0.0
        %825 = vmatprep.subr.mxu0 0.0
        %826 = vmatpush1.msra.mxu0 0.0
        %827 = vmatprep.subr.mxu0 0.0
        %828 = vmatpush1.msra.mxu0 0.0
        %829 = vmatprep.subr.mxu0 0.0
        %830 = vmatpush1.msra.mxu0 0.0
        %831 = vmatprep.subr.mxu0 0.0
        %832 = vmatpush1.msra.mxu0 0.0
        %833 = vmatprep.subr.mxu0 0.0
        %834 = vmatpush1.msra.mxu0 0.0
        %835 = vmatprep.subr.mxu0 0.0
        %836 = vmatpush1.msra.mxu0 0.0
        %837 = vmatprep.subr.mxu0 0.0
        %838 = vmatpush1.msra.mxu0 0.0
        %839 = vmatprep.subr.mxu0 0.0
        %840 = vmatpush1.msra.mxu0 0.0
        %841 = vmatprep.subr.mxu0 0.0
        %842 = vmatpush1.msra.mxu0 %v644
        %843 = vmatprep.subr.mxu0 0.0
        %844 = vmatpush1.msra.mxu0 %v643
        %845 = vmatprep.subr.mxu0 0.0
        %846 = vmatpush1.msra.mxu0 %v642
        %847 = vmatprep.subr.mxu0 0.0
        %848 = vmatpush1.msra.mxu0 %v641
        %849 = vmatprep.subr.mxu0 0.0
        %850 = vmatpush2.msra.mxu0 0.0
        %851 = vmatprep.subr.mxu0 0.0
        %852 = vmatpush2.msra.mxu0 0.0
        %853 = vmatprep.subr.mxu0 0.0
        %854 = vmatpush2.msra.mxu0 0.0
        %855 = vmatprep.subr.mxu0 0.0
        %856 = vmatpush2.msra.mxu0 0.0
        %857 = vmatprep.subr.mxu0 0.0
        %858 = vmatpush2.msra.mxu0 0.0
        %859 = vmatprep.subr.mxu0 0.0
        %860 = vmatpush2.msra.mxu0 0.0
        %861 = vmatprep.subr.mxu0 0.0
        %862 = vmatpush2.msra.mxu0 0.0
        %863 = vmatprep.subr.mxu0 0.0
        %864 = vmatpush2.msra.mxu0 0.0
        %865 = vmatprep.subr.mxu0 0.0
        %866 = vmatpush2.msra.mxu0 0.0
        %867 = vmatprep.subr.mxu0 0.0
        %868 = vmatpush2.msra.mxu0 0.0
        %869 = vmatprep.subr.mxu0 0.0
        %870 = vmatpush2.msra.mxu0 0.0
        %871 = vmatprep.subr.mxu0 0.0
        %872 = vmatpush2.msra.mxu0 0.0
        %873 = vmatprep.subr.mxu0 0.0
        %874 = vmatpush2.msra.mxu0 0.0
        %875 = vmatprep.subr.mxu0 0.0
        %876 = vmatpush2.msra.mxu0 0.0
        %877 = vmatprep.subr.mxu0 0.0
        %878 = vmatpush2.msra.mxu0 0.0
        %879 = vmatprep.subr.mxu0 0.0
        %880 = vmatpush2.msra.mxu0 0.0
        %881 = vmatprep.mubr.f32.mxu0 0.0
        %882 = vmatmul.mubr.f32.gmra.mxu0 %v815
        %v883 = vpop.f32.mrf.mxu0
        %v884 = vadd.f32 %v812, %v883
        %v885 = vpop.f32.mrf.mxu0
        %886 = vdwg.mxu0
        %vm887 = vcmask 64512
        %v889 = vsel %vm887, %v726, 0
        %v892 = vsel %vm887, %v805, 0
        %894 = vmatprep.subr.mxu0 0.0
        %895 = vmatpush1.xpose.msra.mxu0 0.0
        %896 = vmatprep.subr.mxu0 0.0
        %897 = vmatpush1.xpose.msra.mxu0 0.0
        %898 = vmatprep.subr.mxu0 0.0
        %899 = vmatpush1.xpose.msra.mxu0 0.0
        %900 = vmatprep.subr.mxu0 0.0
        %901 = vmatpush1.xpose.msra.mxu0 0.0
        %902 = vmatprep.subr.mxu0 0.0
        %903 = vmatpush1.xpose.msra.mxu0 0.0
        %904 = vmatprep.subr.mxu0 0.0
        %905 = vmatpush1.xpose.msra.mxu0 0.0
        %906 = vmatprep.subr.mxu0 0.0
        %907 = vmatpush1.xpose.msra.mxu0 0.0
        %908 = vmatprep.subr.mxu0 0.0
        %909 = vmatpush1.xpose.msra.mxu0 0.0
        %910 = vmatprep.subr.mxu0 0.0
        %911 = vmatpush1.xpose.msra.mxu0 0.0
        %912 = vmatprep.subr.mxu0 0.0
        %913 = vmatpush1.xpose.msra.mxu0 0.0
        %914 = vmatprep.subr.mxu0 0.0
        %915 = vmatpush1.xpose.msra.mxu0 0.0
        %916 = vmatprep.subr.mxu0 0.0
        %917 = vmatpush1.xpose.msra.mxu0 0.0
        %918 = vmatprep.subr.mxu0 0.0
        %919 = vmatpush1.xpose.msra.mxu0 0.0
        %920 = vmatprep.subr.mxu0 0.0
        %921 = vmatpush1.xpose.msra.mxu0 0.0
        %922 = vmatprep.subr.mxu0 0.0
        %923 = vmatpush1.xpose.msra.mxu0 0.0
        %924 = vmatprep.subr.mxu0 0.0
        %925 = vmatpush1.xpose.msra.mxu0 %v892
        %926 = vmatprep.subr.mxu0 0.0
        %927 = vmatpush2.xpose.msra.mxu0 0.0
        %928 = vmatprep.subr.mxu0 0.0
        %929 = vmatpush2.xpose.msra.mxu0 0.0
        %930 = vmatprep.subr.mxu0 0.0
        %931 = vmatpush2.xpose.msra.mxu0 0.0
        %932 = vmatprep.subr.mxu0 0.0
        %933 = vmatpush2.xpose.msra.mxu0 0.0
        %934 = vmatprep.subr.mxu0 0.0
        %935 = vmatpush2.xpose.msra.mxu0 0.0
        %936 = vmatprep.subr.mxu0 0.0
        %937 = vmatpush2.xpose.msra.mxu0 0.0
        %938 = vmatprep.subr.mxu0 0.0
        %939 = vmatpush2.xpose.msra.mxu0 0.0
        %940 = vmatprep.subr.mxu0 0.0
        %941 = vmatpush2.xpose.msra.mxu0 0.0
        %942 = vmatprep.subr.mxu0 0.0
        %943 = vmatpush2.xpose.msra.mxu0 0.0
        %944 = vmatprep.subr.mxu0 0.0
        %945 = vmatpush2.xpose.msra.mxu0 0.0
        %946 = vmatprep.subr.mxu0 0.0
        %947 = vmatpush2.xpose.msra.mxu0 0.0
        %948 = vmatprep.subr.mxu0 0.0
        %949 = vmatpush2.xpose.msra.mxu0 0.0
        %950 = vmatprep.subr.mxu0 0.0
        %951 = vmatpush2.xpose.msra.mxu0 0.0
        %952 = vmatprep.subr.mxu0 0.0
        %953 = vmatpush2.xpose.msra.mxu0 0.0
        %954 = vmatprep.subr.mxu0 0.0
        %955 = vmatpush2.xpose.msra.mxu0 0.0
        %956 = vmatprep.subr.mxu0 0.0
        %957 = vmatpush2.xpose.msra.mxu0 0.0
        %958 = vmatprep.mubr.f32.mxu0 0.0
        %959 = vmatmul.mubr.f32.gmra.mxu0 %v889
        %v960 = vpop.f32.mrf.mxu0
        %v961 = vadd.f32 0.0, %v960
        %v962 = vpop.f32.mrf.mxu0
        %963 = vdwg.mxu0
        %v964 = vsel %vm632, 1, 0
        %v965 = vlaneseq
        %v966 = vshrl.u32 %v965, 7
        %v967 = vsub.s32 0, %v966
        %v968 = vrot.slane %v964, %v967
        %vm969 = vcmp.eq.s32.totalorder %v968, 1
        %v970 = vsel %vm969, -3.4028235e+38, %v961
        %v971 = vsel %vm887, %v970, -inf
        %972 = vmax.xlane.f32.xlu0 %v971
        %v973 = vpop.xlane.xlu0 %972
        %v974 = vsub.f32 %v970, %v973
        %v975 = vmul.f32 %v974, 1.442695
        %v976 = vpow.pop %v975
        %v977 = vsel %vm887, %v976, 0.0
        %978 = vadd.xlane.f32.xlu0 %v977
        %v979 = vpop.xlane.xlu0 %978
        %v980 = vrcp.pop %v979
        %v981 = vmul.f32 %v976, %v980
        %v982 = vsel %vm969, 0.0, %v981
        %983 = vst.msk [vmem:[%s584] sm:$0xff] %vm887, %v982
        %v985 = vsel %vm887, %v982, 0
        %987 = vmatprep.subr.mxu0 0.0
        %988 = vmatpush1.msra.mxu0 0.0
        %989 = vmatprep.subr.mxu0 0.0
        %990 = vmatpush1.msra.mxu0 0.0
        %991 = vmatprep.subr.mxu0 0.0
        %992 = vmatpush1.msra.mxu0 0.0
        %993 = vmatprep.subr.mxu0 0.0
        %994 = vmatpush1.msra.mxu0 0.0
        %995 = vmatprep.subr.mxu0 0.0
        %996 = vmatpush1.msra.mxu0 0.0
        %997 = vmatprep.subr.mxu0 0.0
        %998 = vmatpush1.msra.mxu0 0.0
        %999 = vmatprep.subr.mxu0 0.0
        %1000 = vmatpush1.msra.mxu0 0.0
        %1001 = vmatprep.subr.mxu0 0.0
        %1002 = vmatpush1.msra.mxu0 0.0
        %1003 = vmatprep.subr.mxu0 0.0
        %1004 = vmatpush1.msra.mxu0 0.0
        %1005 = vmatprep.subr.mxu0 0.0
        %1006 = vmatpush1.msra.mxu0 0.0
        %1007 = vmatprep.subr.mxu0 0.0
        %1008 = vmatpush1.msra.mxu0 0.0
        %1009 = vmatprep.subr.mxu0 0.0
        %1010 = vmatpush1.msra.mxu0 0.0
        %1011 = vmatprep.subr.mxu0 0.0
        %1012 = vmatpush1.msra.mxu0 0.0
        %1013 = vmatprep.subr.mxu0 0.0
        %1014 = vmatpush1.msra.mxu0 0.0
        %1015 = vmatprep.subr.mxu0 0.0
        %1016 = vmatpush1.msra.mxu0 0.0
        %1017 = vmatprep.subr.mxu0 0.0
        %1018 = vmatpush1.msra.mxu0 %v884
        %1019 = vmatprep.subr.mxu0 0.0
        %1020 = vmatpush2.msra.mxu0 0.0
        %1021 = vmatprep.subr.mxu0 0.0
        %1022 = vmatpush2.msra.mxu0 0.0
        %1023 = vmatprep.subr.mxu0 0.0
        %1024 = vmatpush2.msra.mxu0 0.0
        %1025 = vmatprep.subr.mxu0 0.0
        %1026 = vmatpush2.msra.mxu0 0.0
        %1027 = vmatprep.subr.mxu0 0.0
        %1028 = vmatpush2.msra.mxu0 0.0
        %1029 = vmatprep.subr.mxu0 0.0
        %1030 = vmatpush2.msra.mxu0 0.0
        %1031 = vmatprep.subr.mxu0 0.0
        %1032 = vmatpush2.msra.mxu0 0.0
        %1033 = vmatprep.subr.mxu0 0.0
        %1034 = vmatpush2.msra.mxu0 0.0
        %1035 = vmatprep.subr.mxu0 0.0
        %1036 = vmatpush2.msra.mxu0 0.0
        %1037 = vmatprep.subr.mxu0 0.0
        %1038 = vmatpush2.msra.mxu0 0.0
        %1039 = vmatprep.subr.mxu0 0.0
        %1040 = vmatpush2.msra.mxu0 0.0
        %1041 = vmatprep.subr.mxu0 0.0
        %1042 = vmatpush2.msra.mxu0 0.0
        %1043 = vmatprep.subr.mxu0 0.0
        %1044 = vmatpush2.msra.mxu0 0.0
        %1045 = vmatprep.subr.mxu0 0.0
        %1046 = vmatpush2.msra.mxu0 0.0
        %1047 = vmatprep.subr.mxu0 0.0
        %1048 = vmatpush2.msra.mxu0 0.0
        %1049 = vmatprep.subr.mxu0 0.0
        %1050 = vmatpush2.msra.mxu0 0.0
        %1051 = vmatprep.mubr.f32.mxu0 0.0
        %1052 = vmatmul.mubr.f32.gmra.mxu0 %v985
        %v1053 = vpop.f32.mrf.mxu0
        %v1054 = vadd.f32 0.0, %v1053
        %v1055 = vpop.f32.mrf.mxu0
        %1056 = vdwg.mxu0
        %v1058 = vsel %vm887, %v1054, 0
        %1060 = vmatprep.subr.mxu0 0.0
        %1061 = vmatpush1.msra.mxu0 0.0
        %1062 = vmatprep.subr.mxu0 0.0
        %1063 = vmatpush1.msra.mxu0 0.0
        %1064 = vmatprep.subr.mxu0 0.0
        %1065 = vmatpush1.msra.mxu0 0.0
        %1066 = vmatprep.subr.mxu0 0.0
        %1067 = vmatpush1.msra.mxu0 0.0
        %1068 = vmatprep.subr.mxu0 0.0
        %1069 = vmatpush1.msra.mxu0 0.0
        %1070 = vmatprep.subr.mxu0 0.0
        %1071 = vmatpush1.msra.mxu0 0.0
        %1072 = vmatprep.subr.mxu0 0.0
        %1073 = vmatpush1.msra.mxu0 0.0
        %1074 = vmatprep.subr.mxu0 0.0
        %1075 = vmatpush1.msra.mxu0 0.0
        %1076 = vmatprep.subr.mxu0 0.0
        %1077 = vmatpush1.msra.mxu0 0.0
        %1078 = vmatprep.subr.mxu0 0.0
        %1079 = vmatpush1.msra.mxu0 0.0
        %1080 = vmatprep.subr.mxu0 0.0
        %1081 = vmatpush1.msra.mxu0 0.0
        %1082 = vmatprep.subr.mxu0 0.0
        %1083 = vmatpush1.msra.mxu0 0.0
        %1084 = vmatprep.subr.mxu0 0.0
        %1085 = vmatpush1.msra.mxu0 0.0
        %1086 = vmatprep.subr.mxu0 0.0
        %1087 = vmatpush1.msra.mxu0 0.0
        %1088 = vmatprep.subr.mxu0 0.0
        %1089 = vmatpush1.msra.mxu0 0.0
        %1090 = vmatprep.subr.mxu0 0.0
        %1091 = vmatpush1.msra.mxu0 %v645
        %1092 = vmatprep.subr.mxu0 0.0
        %1093 = vmatpush2.msra.mxu0 0.0
        %1094 = vmatprep.subr.mxu0 0.0
        %1095 = vmatpush2.msra.mxu0 0.0
        %1096 = vmatprep.subr.mxu0 0.0
        %1097 = vmatpush2.msra.mxu0 0.0
        %1098 = vmatprep.subr.mxu0 0.0
        %1099 = vmatpush2.msra.mxu0 0.0
        %1100 = vmatprep.subr.mxu0 0.0
        %1101 = vmatpush2.msra.mxu0 0.0
        %1102 = vmatprep.subr.mxu0 0.0
        %1103 = vmatpush2.msra.mxu0 0.0
        %1104 = vmatprep.subr.mxu0 0.0
        %1105 = vmatpush2.msra.mxu0 0.0
        %1106 = vmatprep.subr.mxu0 0.0
        %1107 = vmatpush2.msra.mxu0 0.0
        %1108 = vmatprep.subr.mxu0 0.0
        %1109 = vmatpush2.msra.mxu0 0.0
        %1110 = vmatprep.subr.mxu0 0.0
        %1111 = vmatpush2.msra.mxu0 0.0
        %1112 = vmatprep.subr.mxu0 0.0
        %1113 = vmatpush2.msra.mxu0 0.0
        %1114 = vmatprep.subr.mxu0 0.0
        %1115 = vmatpush2.msra.mxu0 0.0
        %1116 = vmatprep.subr.mxu0 0.0
        %1117 = vmatpush2.msra.mxu0 0.0
        %1118 = vmatprep.subr.mxu0 0.0
        %1119 = vmatpush2.msra.mxu0 0.0
        %1120 = vmatprep.subr.mxu0 0.0
        %1121 = vmatpush2.msra.mxu0 0.0
        %1122 = vmatprep.subr.mxu0 0.0
        %1123 = vmatpush2.msra.mxu0 0.0
        %1124 = vmatprep.mubr.f32.mxu0 0.0
        %1125 = vmatmul.mubr.f32.gmra.mxu0 %v1058
        %v1126 = vpop.f32.mrf.mxu0
        %v1127 = vadd.f32 0.0, %v1126
        %v1128 = vpop.f32.mrf.mxu0
        %1129 = vdwg.mxu0
        %p1130 = scmp.eq.s32.totalorder %s36, 0
        // Predicated region
        $region69: #{tpu_custom_call.1} parent=67 // pred_check
          %p1131 = pneg %p1130
        $region70: #{tpu_custom_call.1} parent=67 // pred_check_branch
          %1133 = sbr.rel (%p1131) target = $region72
        $region71: #{tpu_custom_call.1} parent=67 // pred_region
          %1134 = vst.msk [vmem:[#allocation2] sm:$0xff] %vm655, 0.0
        $region72: #{tpu_custom_call.1} parent=67 // pred_fallthru
          _
        %v1135 = vld [vmem:[#allocation2] sm:$0xff]
        %v1136 = vadd.f32 %v1135, %v1127
        %1137 = vst.msk [vmem:[#allocation2] sm:$0xff] %vm655, %v1136
        %p1138 = scmp.eq.s32.totalorder %s36, 3
        // Predicated region
        $region73: #{tpu_custom_call.1} parent=67 // pred_check
          %p1139 = pneg %p1138
        $region74: #{tpu_custom_call.1} parent=67 // pred_check_branch
          %1141 = sbr.rel (%p1139) target = $region76
        $region75: #{tpu_custom_call.1} parent=67 // pred_region
          %v1142 = vld [vmem:[#allocation2] sm:$0xff]
          %v1143 = vld [vmem:[%s11] sm:$0x1]
          %v1145 = vlaneseq
          %v1146 = vshrl.u32 %v1145, 7
          %v1147 = vsub.s32 0, %v1146
          %v1148 = vrot.slane %v1143, %v1147
          %v1150 = vadd.f32 %v1142, %v1148
          %1151 = vst.msk [vmem:[%s577] sm:$0xff] %vm655, %v1150
        $region76: #{tpu_custom_call.1} parent=67 // pred_fallthru
          _
        %s1152 = sand.u32 %s358, 1
        %s1153 = scalar_lea.sflag [#allocation4], %s1152
        %s1154 = sand.u32 %s358, 1
        %s1155 = smul.addr %s1154, 8
        %s1156 = scalar_lea.vmem [#allocation3], %s1155
        %s1157 = sand.u32 %s386, 1
        %s1158 = scalar_lea.sflag [#allocation6], %s1157
        %s1159 = sand.u32 %s386, 1
        %s1160 = smul.addr %s1159, 8
        %s1161 = scalar_lea.vmem [#allocation5], %s1160
        // Predicated region
        $region77: #{tpu_custom_call.1} parent=67 // pred_check
          %p1162 = pneg %p368
        $region78: #{tpu_custom_call.1} parent=67 // pred_check_branch
          %1164 = sbr.rel (%p1162) target = $region80
        $region79: #{tpu_custom_call.1} parent=67 // pred_region
          %s1166 = ssub.s32 128, 128
          %1167 = vsyncadd %s1153, %s1166
          %s1168 = smul.addr %s35, 128
          %s1169 = scalar_lea.hbm %s12, %s1168
          %s1171 = sshll.u32 %s1156, 4
          %s1172 = int_to_ptr.vmem [resolvable:$true] %s1171
          %1174 = dma.vmem_to_hbm [thread:$0]  %s1172, 128, %s1169, %s1153
        $region80: #{tpu_custom_call.1} parent=67 // pred_fallthru
          _
        // Predicated region
        $region81: #{tpu_custom_call.1} parent=67 // pred_check
          %p1175 = pneg %p396
        $region82: #{tpu_custom_call.1} parent=67 // pred_check_branch
          %1177 = sbr.rel (%p1175) target = $region84
        $region83: #{tpu_custom_call.1} parent=67 // pred_region
          %s1179 = ssub.s32 128, 128
          %1180 = vsyncadd %s1158, %s1179
          %s1181 = smul.addr %s35, 4
          %s1182 = sadd.s32 %s36, %s1181
          %s1183 = smul.addr %s1182, 128
          %s1184 = scalar_lea.hbm %s13, %s1183
          %s1186 = sshll.u32 %s1161, 4
          %s1187 = int_to_ptr.vmem [resolvable:$true] %s1186
          %1189 = dma.vmem_to_hbm [thread:$0]  %s1187, 128, %s1184, %s1158
        $region84: #{tpu_custom_call.1} parent=67 // pred_fallthru
          _
      $region68: #{tpu_custom_call.1} parent=5 // pred_fallthru
        _
      %p1190 = scmp.le.s32.totalorder 2, %s26
      // Predicated region
      $region85: #{tpu_custom_call.1} parent=5 // pred_check
        %p1191 = pneg %p1190
      $region86: #{tpu_custom_call.1} parent=5 // pred_check_branch
        %1193 = sbr.rel (%p1191) target = $region88
      $region87: #{tpu_custom_call.1} parent=5 // pred_region
        %s1194 = ssub.s32 %s26, 2
        // Predicated region
        $region89: #{tpu_custom_call.1} parent=87 // pred_check
          %p1195 = pneg %p374
        $region90: #{tpu_custom_call.1} parent=87 // pred_check_branch
          %1197 = sbr.rel (%p1195) target = $region92
        $region91: #{tpu_custom_call.1} parent=87 // pred_region
          %s1198 = sand.u32 %s359, 1
          %s1199 = scalar_lea.sflag [#allocation4], %s1198
          %s1200 = sand.u32 %s359, 1
          %s1201 = smul.addr %s1200, 8
          %s1202 = scalar_lea.vmem [#allocation3], %s1201
          %1203 = dma.done %s1199, 128
        $region92: #{tpu_custom_call.1} parent=87 // pred_fallthru
          _
        // Predicated region
        $region93: #{tpu_custom_call.1} parent=87 // pred_check
          %p1204 = pneg %p402
        $region94: #{tpu_custom_call.1} parent=87 // pred_check_branch
          %1206 = sbr.rel (%p1204) target = $region96
        $region95: #{tpu_custom_call.1} parent=87 // pred_region
          %s1207 = sand.u32 %s387, 1
          %s1208 = scalar_lea.sflag [#allocation6], %s1207
          %s1209 = sand.u32 %s387, 1
          %s1210 = smul.addr %s1209, 8
          %s1211 = scalar_lea.vmem [#allocation5], %s1210
          %1212 = dma.done %s1208, 128
        $region96: #{tpu_custom_call.1} parent=87 // pred_fallthru
          _
      $region88: #{tpu_custom_call.1} parent=5 // pred_fallthru
        _
    $region6: #{tpu_custom_call.1} parent=1 // loop_footer
      %s30 = sadd.s32 1, %s26
    $region7: #{tpu_custom_call.1} parent=1 // loop_footer_branch
      %25 = sbr.rel target = $region3
    $region8: #{tpu_custom_call.1} parent=1 // loop_exit
      _
    %1213 = vsyncpa [#allocation4], 1
    %s1214 = scalar_lea.sflag [#allocation4], 1
    %1215 = vsyncpa %s1214, 1
    %1216 = vsyncpa [#allocation6], 1
    %s1217 = scalar_lea.sflag [#allocation6], 1
    %1218 = vsyncpa %s1217, 1

</llo_original>
